<compile_context>
chip_gen: v7x
topology: tpu7x:2x2x1
jax: 0.10.0
libtpu: 0.0.40
codegen_flags: <defaults>
</compile_context>

<pallas_src>
import jax
import jax.numpy as jnp
import numpy as np
from jax.experimental import pallas as pl
from jax.experimental.pallas import tpu as pltpu


def _round_up(a, m):
    return -(-a // m) * m


def probcbm_kernel(alpha_ref, x_ref, w1_ref, b1_ref, wvt_ref, bv_ref,
                   cpt_ref, cnt_ref, wl_ref, bl_ref, p_ref, y_ref):
    tile_n = p_ref.shape[0]
    S, K_pad = wvt_ref.shape
    E = w1_ref.shape[1]

    # conv1x1 == per-pixel channel matmul; batch and spatial folded into rows so
    # the MXU sees one (tile_n*S, C_in) @ (C_in, E) contraction.
    zc = jnp.dot(x_ref[...], w1_ref[...],
                 preferred_element_type=jnp.float32) + b1_ref[...]        # (tile_n*S, E)

    # visual_embeddings (Linear over the spatial dim) fused with the torch
    # .transpose(1, 2): reorder the small conv output so rows are (n, e) and
    # lanes are s (one minor-dim swap via einshape), then ONE non-batched 2D
    # matmul with a K_pad-wide (128-multiple) lane output.  No broadcast of wv
    # over the batch tile, no per-sample MXU pushes.
    zc3 = zc.reshape(tile_n, S, E)
    zce = pltpu.einshape("nse->nes", zc3).reshape(tile_n * E, S)
    zce = zce.astype(wvt_ref.dtype)
    z2 = jnp.dot(zce, wvt_ref[...],
                 preferred_element_type=jnp.float32) + bv_ref[...]        # (tile_n*E, K_pad)

    # Concept probabilities: Euclidean distance to pos / neg concept embeddings.
    # Embeddings are stored pre-transposed (E, K_pad) so no in-kernel transpose.
    z3 = z2.reshape(tile_n, E, K_pad)                                      # z[n, e, k]
    dn2 = jnp.sum((z3 - cnt_ref[...][None, :, :]) ** 2, axis=1)           # (tile_n, K_pad)
    dp2 = jnp.sum((z3 - cpt_ref[...][None, :, :]) ** 2, axis=1)
    # alpha init is 1.0 (>0) so the torch `if alpha < 0` re-init branch is dead.
    logits = alpha_ref[0] * (jnp.sqrt(dn2) - jnp.sqrt(dp2))
    p_ref[...] = jax.nn.sigmoid(logits)                                    # lane-dense store

    # label_predictor on flatten(z): one (tile_n, E*K_pad) @ (E*K_pad, C_pad)
    # matmul (wl pre-permuted/padded in the wrapper so z's natural (n, e, k)
    # flattening matches; K_pad is a 128-multiple so the reshape is lane-friendly).
    z_flat = z2.reshape(tile_n, E * K_pad).astype(wl_ref.dtype)
    y_ref[...] = jnp.dot(z_flat, wl_ref[...],
                         preferred_element_type=jnp.float32) + bl_ref[...]  # lane-dense store


def probcbm_forward(feat_nhwc, c, params, *, tile_n=64, compute_dtype=jnp.float32,
                    vmem_budget_bytes=24 * 1024 * 1024,
                    vmem_limit_bytes=32 * 1024 * 1024):
    """ProbCBM forward pass (post-backbone).

    feat_nhwc: (N, H, W, C_in) backbone feature map in NHWC — the wrapper only
      reshapes (no transpose of the dominant array); the backbone should emit
      NHWC directly.  `c` is unused in the forward pass (API parity with torch).
    tile_n: requested samples per grid step; rounded to a multiple of 8, clamped
      so the double-buffered x tile + weights + intermediates fit the VMEM
      budget, and so the parallel grid axis has >= 2 (ideally even) steps for
      v7x's two TensorCores.
    compute_dtype: dtype of the MXU matmul operands (accumulation is always
      f32).  Use jnp.bfloat16 at production scale (C_in=512) — halves the
      dominant HBM->VMEM DMA; f32 is kept here for exact toy-shape comparison.
    """
    del c
    N, H, W, C_in = feat_nhwc.shape
    S = H * W
    E = params["conv_w"].shape[0]
    K = params["wv"].shape[0]
    n_cls = params["wl"].shape[0]

    # Lane-dense (128-multiple) padded widths for both outputs.  Padded concepts
    # / classes yield p=0.5 / zero logits and are sliced off below.
    K_pad = _round_up(K, 128)
    C_pad = _round_up(n_cls, 128)
    cbytes = jnp.dtype(compute_dtype).itemsize

    def vmem_estimate(t):
        x_blk = 2 * t * S * C_in * cbytes                         # double-buffered input tile
        outs = 2 * t * (K_pad + C_pad) * 4                        # double-buffered outputs
        weights = (2 * (C_in * E + S * K_pad + E * K_pad * C_pad) * cbytes
                   + 2 * (E + K_pad + C_pad + 2 * E * K_pad) * 4)
        interm = t * (2 * S * E + 4 * E * K_pad) * 4              # zc/zce/z2/diff temps (f32)
        return x_blk + outs + weights + interm

    tile_n = max(8, _round_up(min(tile_n, max(N, 8)), 8))
    while tile_n > 8 and vmem_estimate(tile_n) > vmem_budget_bytes:
        tile_n -= 8
    if N > 8:
        # v7x: guarantee >= 2 grid steps (both TensorCores busy); prefer even.
        tile_n = min(tile_n, _round_up(pl.cdiv(N, 2), 8))
        g = pl.cdiv(N, tile_n)
        if g > 1 and g % 2 == 1:
            t2 = max(8, _round_up(pl.cdiv(N, g + 1), 8))
            if pl.cdiv(N, t2) % 2 == 0:
                tile_n = t2
    n_pad = _round_up(N, tile_n)
    grid_n = n_pad // tile_n

    # Layout plumbing in the wrapper (small arrays, done once): weights are
    # pre-transposed / pre-flattened / zero-padded so the kernel has no
    # transposes of its own and all stores are full-lane.
    x = feat_nhwc.reshape(N, S, C_in)
    if n_pad != N:
        x = jnp.pad(x, ((0, n_pad - N), (0, 0), (0, 0)))
    x2 = x.reshape(n_pad * S, C_in).astype(compute_dtype)

    w1 = params["conv_w"].reshape(E, C_in).T.astype(compute_dtype)           # (C_in, E)
    b1 = params["conv_b"].reshape(1, E).astype(jnp.float32)
    wvt = jnp.pad(params["wv"].T, ((0, 0), (0, K_pad - K))).astype(compute_dtype)   # (S, K_pad)
    bv = jnp.pad(params["bv"].reshape(1, K),
                 ((0, 0), (0, K_pad - K))).astype(jnp.float32)               # (1, K_pad)
    cpt = jnp.pad(params["pos_emb"].T,
                  ((0, 0), (0, K_pad - K))).astype(jnp.float32)              # (E, K_pad)
    cnt = jnp.pad(params["neg_emb"].T,
                  ((0, 0), (0, K_pad - K))).astype(jnp.float32)              # (E, K_pad)
    wl3 = params["wl"].reshape(n_cls, K, E).transpose(2, 1, 0)               # (E, K, n_cls)
    wl3 = jnp.pad(wl3, ((0, 0), (0, K_pad - K), (0, C_pad - n_cls)))
    wl = wl3.reshape(E * K_pad, C_pad).astype(compute_dtype)                 # (E*K_pad, C_pad)
    bl = jnp.pad(params["bl"].reshape(1, n_cls),
                 ((0, 0), (0, C_pad - n_cls))).astype(jnp.float32)           # (1, C_pad)
    alpha = params["alpha"].reshape(1).astype(jnp.float32)

    flops = (2 * n_pad * S * C_in * E
             + 2 * n_pad * S * E * K_pad
             + 2 * n_pad * E * K_pad * C_pad)
    bytes_accessed = (x2.size * cbytes
                      + (w1.size + wvt.size + wl.size) * cbytes
                      + (b1.size + bv.size + cpt.size + cnt.size + bl.size + 1) * 4
                      + n_pad * (K_pad + C_pad) * 4)

    p, y = pl.pallas_call(
        probcbm_kernel,
        grid=(grid_n,),
        in_specs=[
            pl.BlockSpec(memory_space=pltpu.MemorySpace.SMEM),               # alpha scalar
            pl.BlockSpec((tile_n * S, C_in), lambda i: (i, 0)),              # x, batch tile
            pl.BlockSpec((C_in, E), lambda i: (0, 0)),                       # conv1x1 W^T
            pl.BlockSpec((1, E), lambda i: (0, 0)),                          # conv1x1 bias
            pl.BlockSpec((S, K_pad), lambda i: (0, 0)),                      # visual_embeddings W^T
            pl.BlockSpec((1, K_pad), lambda i: (0, 0)),                      # visual_embeddings b
            pl.BlockSpec((E, K_pad), lambda i: (0, 0)),                      # pos embeddings^T
            pl.BlockSpec((E, K_pad), lambda i: (0, 0)),                      # neg embeddings^T
            pl.BlockSpec((E * K_pad, C_pad), lambda i: (0, 0)),              # label_predictor W
            pl.BlockSpec((1, C_pad), lambda i: (0, 0)),                      # label_predictor b
        ],
        out_specs=(
            pl.BlockSpec((tile_n, K_pad), lambda i: (i, 0)),
            pl.BlockSpec((tile_n, C_pad), lambda i: (i, 0)),
        ),
        out_shape=(
            jax.ShapeDtypeStruct((n_pad, K_pad), jnp.float32),
            jax.ShapeDtypeStruct((n_pad, C_pad), jnp.float32),
        ),
        compiler_params=pltpu.CompilerParams(
            dimension_semantics=("parallel",),
            vmem_limit_bytes=vmem_limit_bytes),
        cost_estimate=pl.CostEstimate(
            flops=flops,
            transcendentals=3 * n_pad * K_pad,
            bytes_accessed=bytes_accessed),
    )(alpha, x2, w1, b1, wvt, bv, cpt, cnt, wl, bl)

    return p[:N, :K], y[:N, :n_cls]


def probcbm_ref(feat_nhwc, params):
    """Pure-JAX reference mirroring the torch forward (post-backbone)."""
    N, H, W, C_in = feat_nhwc.shape
    S = H * W
    E = params["conv_w"].shape[0]
    x = feat_nhwc.reshape(N, S, C_in)
    zc = jnp.einsum("nsc,ec->nse", x, params["conv_w"].reshape(E, C_in)) \
        + params["conv_b"][None, None, :]
    ze = jnp.einsum("nse,ks->nek", zc, params["wv"]) + params["bv"][None, None, :]
    z = jnp.transpose(ze, (0, 2, 1))                                         # (N, K, E)
    dist_n = jnp.linalg.norm(z - params["neg_emb"][None], axis=-1)
    dist_p = jnp.linalg.norm(z - params["pos_emb"][None], axis=-1)
    logits = params["alpha"][0] * (dist_n - dist_p)
    p = jax.nn.sigmoid(logits)
    y = z.reshape(N, -1) @ params["wl"].T + params["bl"][None, :]
    return p, y


if __name__ == "__main__":
    # Small, forward-consistent shapes (post-backbone feature map, NHWC).
    N = 16              # batch -> two 8-sample grid steps (both v7x TensorCores busy)
    C_in = 16           # backbone output channels (resnet34 fc.in_features, shrunk)
    backbone_dim = 4    # spatial H = W after the backbone -> S = 16
    E = 16              # emb_dim
    K = 8               # n_concepts
    n_classes = 10

    key = jax.random.PRNGKey(0)
    ks = jax.random.split(key, 10)
    params = {
        "conv_w": jax.random.normal(ks[0], (E, C_in, 1, 1), jnp.float32) * 0.1,
        "conv_b": jax.random.normal(ks[1], (E,), jnp.float32) * 0.1,
        "wv": jax.random.normal(ks[2], (K, backbone_dim ** 2), jnp.float32) * 0.1,
        "bv": jax.random.normal(ks[3], (K,), jnp.float32) * 0.1,
        "pos_emb": jax.random.normal(ks[4], (K, E), jnp.float32),
        "neg_emb": jax.random.normal(ks[5], (K, E), jnp.float32),
        "wl": jax.random.normal(ks[6], (n_classes, K * E), jnp.float32) * 0.1,
        "bl": jax.random.normal(ks[7], (n_classes,), jnp.float32) * 0.1,
        "alpha": jnp.ones((1,), jnp.float32),
    }

    feat = jax.random.normal(ks[8], (N, backbone_dim, backbone_dim, C_in), jnp.float32)
    c = jnp.zeros((N, K), jnp.float32)   # unused by forward; API parity

    p, y = probcbm_forward(feat, c, params)
    p, y = jax.block_until_ready((p, y))

    p_ref, y_ref = probcbm_ref(feat, params)
    assert p.shape == (N, K) and y.shape == (N, n_classes)
    assert np.allclose(np.asarray(p), np.asarray(p_ref), rtol=2e-3, atol=2e-3)
    assert np.allclose(np.asarray(y), np.asarray(y_ref), rtol=2e-3, atol=2e-3)
    print("KERNEL_OK")
</pallas_src>

<mosaic_0001>
module attributes {stable_mosaic.version = 11 : i64} {
  func.func @probcbm_kernel(%arg0: i32, %arg1: memref<1xf32, #tpu.memory_space<smem>>, %arg2: memref<128x16xf32, #tpu.memory_space<vmem>>, %arg3: memref<16x16xf32, #tpu.memory_space<vmem>>, %arg4: memref<1x16xf32, #tpu.memory_space<vmem>>, %arg5: memref<16x128xf32, #tpu.memory_space<vmem>>, %arg6: memref<1x128xf32, #tpu.memory_space<vmem>>, %arg7: memref<16x128xf32, #tpu.memory_space<vmem>>, %arg8: memref<16x128xf32, #tpu.memory_space<vmem>>, %arg9: memref<2048x128xf32, #tpu.memory_space<vmem>>, %arg10: memref<1x128xf32, #tpu.memory_space<vmem>>, %arg11: memref<8x128xf32, #tpu.memory_space<vmem>>, %arg12: memref<8x128xf32, #tpu.memory_space<vmem>>) attributes {dimension_semantics = [#tpu.dimension_semantics<parallel>], iteration_bounds = array<i64: 2>, scalar_prefetch = 0 : i64, scratch_operands = 0 : i64, tpu.core_type = #tpu.core_type<tc>, window_params = [{transform_indices = @transform_0, window_bounds = array<i64: 1>}, {transform_indices = @transform_1, window_bounds = array<i64: 128, 16>}, {pipeline_mode = #tpu.pipeline_mode<synchronous>, transform_indices = @transform_2, window_bounds = array<i64: 16, 16>}, {pipeline_mode = #tpu.pipeline_mode<synchronous>, transform_indices = @transform_3, window_bounds = array<i64: 1, 16>}, {pipeline_mode = #tpu.pipeline_mode<synchronous>, transform_indices = @transform_4, window_bounds = array<i64: 16, 128>}, {pipeline_mode = #tpu.pipeline_mode<synchronous>, transform_indices = @transform_5, window_bounds = array<i64: 1, 128>}, {pipeline_mode = #tpu.pipeline_mode<synchronous>, transform_indices = @transform_6, window_bounds = array<i64: 16, 128>}, {pipeline_mode = #tpu.pipeline_mode<synchronous>, transform_indices = @transform_7, window_bounds = array<i64: 16, 128>}, {pipeline_mode = #tpu.pipeline_mode<synchronous>, transform_indices = @transform_8, window_bounds = array<i64: 2048, 128>}, {pipeline_mode = #tpu.pipeline_mode<synchronous>, transform_indices = @transform_9, window_bounds = array<i64: 1, 128>}, {transform_indices = @transform_10, window_bounds = array<i64: 8, 128>}, {transform_indices = @transform_11, window_bounds = array<i64: 8, 128>}]} {
    %c0 = arith.constant 0 : index
    %c0_0 = arith.constant 0 : index
    %0 = vector.load %arg2[%c0, %c0_0] : memref<128x16xf32, #tpu.memory_space<vmem>>, vector<128x16xf32>
    %c0_1 = arith.constant 0 : index
    %c0_2 = arith.constant 0 : index
    %1 = vector.load %arg3[%c0_1, %c0_2] : memref<16x16xf32, #tpu.memory_space<vmem>>, vector<16x16xf32>
    %cst = arith.constant dense<0.000000e+00> : vector<128x16xf32>
    %2 = tpu.matmul %0, %1, %cst {dimension_numbers = #tpu.dot_dimension_numbers<[1], [0], [0], [1], [0, 0, 1, 1], [], []>} : vector<128x16xf32>, vector<16x16xf32>, vector<128x16xf32> -> vector<128x16xf32>
    %c0_3 = arith.constant 0 : index
    %c0_4 = arith.constant 0 : index
    %3 = vector.load %arg4[%c0_3, %c0_4] : memref<1x16xf32, #tpu.memory_space<vmem>>, vector<1x16xf32>
    %4 = vector.broadcast %3 : vector<1x16xf32> to vector<128x16xf32>
    %5 = arith.addf %2, %4 : vector<128x16xf32>
    %6 = vector.shape_cast %5 : vector<128x16xf32> to vector<8x16x16xf32>
    %7 = tpu.transpose %6, [0, 2, 1] : vector<8x16x16xf32> -> vector<8x16x16xf32>
    %8 = vector.shape_cast %7 : vector<8x16x16xf32> to vector<128x16xf32>
    %c0_5 = arith.constant 0 : index
    %c0_6 = arith.constant 0 : index
    %9 = vector.load %arg5[%c0_5, %c0_6] : memref<16x128xf32, #tpu.memory_space<vmem>>, vector<16x128xf32>
    %cst_7 = arith.constant dense<0.000000e+00> : vector<128x128xf32>
    %10 = tpu.matmul %8, %9, %cst_7 {dimension_numbers = #tpu.dot_dimension_numbers<[1], [0], [0], [1], [0, 0, 1, 1], [], []>} : vector<128x16xf32>, vector<16x128xf32>, vector<128x128xf32> -> vector<128x128xf32>
    %c0_8 = arith.constant 0 : index
    %c0_9 = arith.constant 0 : index
    %11 = vector.load %arg6[%c0_8, %c0_9] : memref<1x128xf32, #tpu.memory_space<vmem>>, vector<1x128xf32>
    %12 = vector.broadcast %11 : vector<1x128xf32> to vector<128x128xf32>
    %13 = arith.addf %10, %12 : vector<128x128xf32>
    %14 = vector.shape_cast %13 : vector<128x128xf32> to vector<8x16x128xf32>
    %c0_10 = arith.constant 0 : index
    %c0_11 = arith.constant 0 : index
    %15 = vector.load %arg8[%c0_10, %c0_11] : memref<16x128xf32, #tpu.memory_space<vmem>>, vector<16x128xf32>
    %16 = vector.shape_cast %15 : vector<16x128xf32> to vector<1x16x128xf32>
    %17 = vector.broadcast %16 : vector<1x16x128xf32> to vector<8x16x128xf32>
    %18 = arith.subf %14, %17 : vector<8x16x128xf32>
    %19 = arith.mulf %18, %18 : vector<8x16x128xf32>
    %cst_12 = arith.constant dense<0.000000e+00> : vector<8x128xf32>
    %20 = vector.multi_reduction <add>, %19, %cst_12 [1] : vector<8x16x128xf32> to vector<8x128xf32>
    %c0_13 = arith.constant 0 : index
    %c0_14 = arith.constant 0 : index
    %21 = vector.load %arg7[%c0_13, %c0_14] : memref<16x128xf32, #tpu.memory_space<vmem>>, vector<16x128xf32>
    %22 = vector.shape_cast %21 : vector<16x128xf32> to vector<1x16x128xf32>
    %23 = vector.broadcast %22 : vector<1x16x128xf32> to vector<8x16x128xf32>
    %24 = arith.subf %14, %23 : vector<8x16x128xf32>
    %25 = arith.mulf %24, %24 : vector<8x16x128xf32>
    %cst_15 = arith.constant dense<0.000000e+00> : vector<8x128xf32>
    %26 = vector.multi_reduction <add>, %25, %cst_15 [1] : vector<8x16x128xf32> to vector<8x128xf32>
    %c0_16 = arith.constant 0 : index
    %27 = memref.load %arg1[%c0_16] : memref<1xf32, #tpu.memory_space<smem>>
    %28 = math.sqrt %20 : vector<8x128xf32>
    %29 = math.sqrt %26 : vector<8x128xf32>
    %30 = arith.subf %28, %29 : vector<8x128xf32>
    %31 = vector.broadcast %27 : f32 to vector<8x128xf32>
    %32 = arith.mulf %31, %30 : vector<8x128xf32>
    %33 = arith.negf %32 : vector<8x128xf32>
    %34 = math.exp %33 : vector<8x128xf32>
    %cst_17 = arith.constant 1.000000e+00 : f32
    %35 = vector.broadcast %cst_17 : f32 to vector<8x128xf32>
    %36 = arith.addf %35, %34 : vector<8x128xf32>
    %37 = arith.divf %35, %36 : vector<8x128xf32>
    %c0_18 = arith.constant 0 : index
    %c0_19 = arith.constant 0 : index
    %38 = vector.load %arg11[%c0_18, %c0_19] : memref<8x128xf32, #tpu.memory_space<vmem>>, vector<8x128xf32>
    tpu.vector_store %arg11[%c0_18, %c0_19], %37 {strides = array<i32>} : memref<8x128xf32, #tpu.memory_space<vmem>>, vector<8x128xf32>,
    %39 = vector.shape_cast %13 : vector<128x128xf32> to vector<8x2048xf32>
    %c0_20 = arith.constant 0 : index
    %c0_21 = arith.constant 0 : index
    %40 = vector.load %arg9[%c0_20, %c0_21] : memref<2048x128xf32, #tpu.memory_space<vmem>>, vector<2048x128xf32>
    %cst_22 = arith.constant dense<0.000000e+00> : vector<8x128xf32>
    %41 = tpu.matmul %39, %40, %cst_22 {dimension_numbers = #tpu.dot_dimension_numbers<[1], [0], [0], [1], [0, 0, 1, 1], [], []>} : vector<8x2048xf32>, vector<2048x128xf32>, vector<8x128xf32> -> vector<8x128xf32>
    %c0_23 = arith.constant 0 : index
    %c0_24 = arith.constant 0 : index
    %42 = vector.load %arg10[%c0_23, %c0_24] : memref<1x128xf32, #tpu.memory_space<vmem>>, vector<1x128xf32>
    %43 = vector.broadcast %42 : vector<1x128xf32> to vector<8x128xf32>
    %44 = arith.addf %41, %43 : vector<8x128xf32>
    %c0_25 = arith.constant 0 : index
    %c0_26 = arith.constant 0 : index
    %45 = vector.load %arg12[%c0_25, %c0_26] : memref<8x128xf32, #tpu.memory_space<vmem>>, vector<8x128xf32>
    tpu.vector_store %arg12[%c0_25, %c0_26], %44 {strides = array<i32>} : memref<8x128xf32, #tpu.memory_space<vmem>>, vector<8x128xf32>,
    return
  }
  func.func @transform_0(%arg0: i32) -> i32 {
    %c0_i32 = arith.constant 0 : i32
    %c0_i32_0 = arith.constant 0 : i32
    return %c0_i32 : i32
  }
  func.func @transform_1(%arg0: i32) -> (i32, i32) {
    %c0_i32 = arith.constant 0 : i32
    %c0_i32_0 = arith.constant 0 : i32
    return %arg0, %c0_i32 : i32, i32
  }
  func.func @transform_2(%arg0: i32) -> (i32, i32) {
    %c0_i32 = arith.constant 0 : i32
    %c0_i32_0 = arith.constant 0 : i32
    %c0_i32_1 = arith.constant 0 : i32
    return %c0_i32, %c0_i32_0 : i32, i32
  }
  func.func @transform_3(%arg0: i32) -> (i32, i32) {
    %c0_i32 = arith.constant 0 : i32
    %c0_i32_0 = arith.constant 0 : i32
    %c0_i32_1 = arith.constant 0 : i32
    return %c0_i32, %c0_i32_0 : i32, i32
  }
  func.func @transform_4(%arg0: i32) -> (i32, i32) {
    %c0_i32 = arith.constant 0 : i32
    %c0_i32_0 = arith.constant 0 : i32
    %c0_i32_1 = arith.constant 0 : i32
    return %c0_i32, %c0_i32_0 : i32, i32
  }
  func.func @transform_5(%arg0: i32) -> (i32, i32) {
    %c0_i32 = arith.constant 0 : i32
    %c0_i32_0 = arith.constant 0 : i32
    %c0_i32_1 = arith.constant 0 : i32
    return %c0_i32, %c0_i32_0 : i32, i32
  }
  func.func @transform_6(%arg0: i32) -> (i32, i32) {
    %c0_i32 = arith.constant 0 : i32
    %c0_i32_0 = arith.constant 0 : i32
    %c0_i32_1 = arith.constant 0 : i32
    return %c0_i32, %c0_i32_0 : i32, i32
  }
  func.func @transform_7(%arg0: i32) -> (i32, i32) {
    %c0_i32 = arith.constant 0 : i32
    %c0_i32_0 = arith.constant 0 : i32
    %c0_i32_1 = arith.constant 0 : i32
    return %c0_i32, %c0_i32_0 : i32, i32
  }
  func.func @transform_8(%arg0: i32) -> (i32, i32) {
    %c0_i32 = arith.constant 0 : i32
    %c0_i32_0 = arith.constant 0 : i32
    %c0_i32_1 = arith.constant 0 : i32
    return %c0_i32, %c0_i32_0 : i32, i32
  }
  func.func @transform_9(%arg0: i32) -> (i32, i32) {
    %c0_i32 = arith.constant 0 : i32
    %c0_i32_0 = arith.constant 0 : i32
    %c0_i32_1 = arith.constant 0 : i32
    return %c0_i32, %c0_i32_0 : i32, i32
  }
  func.func @transform_10(%arg0: i32) -> (i32, i32) {
    %c0_i32 = arith.constant 0 : i32
    %c0_i32_0 = arith.constant 0 : i32
    return %arg0, %c0_i32 : i32, i32
  }
  func.func @transform_11(%arg0: i32) -> (i32, i32) {
    %c0_i32 = arith.constant 0 : i32
    %c0_i32_0 = arith.constant 0 : i32
    return %arg0, %c0_i32 : i32, i32
  }
}

</mosaic_0001>

<llo_original>
// kernel: tpu_custom_call.1
$region0: #{tpu_custom_call.1}
  #allocation0 [shape = 'u32[]', space=smem, size = 0x4, offset = 0x4, fixed_abs, tag = 'smem constant byte address 0x4 - core index']
  #allocation1 [shape = 'u32[144,128]{1,0:T(1,128)}', space=vmem, size = 0x12000, scoped, tag = 'internal scratch']
  #allocation2 [shape = 'f32[1]{0:T(128)S(6)}', space=smem, size = 0x200, scoped, tag = 'scoped memory for tpu_custom_call.1']
  %s0 = inlined_call_operand.<no memory space> [shape: f32[1], index: 0, kind: input, shape index: {}]
  %s1 = inlined_call_operand.vmem [shape: f32[256,16], index: 1, kind: input, shape index: {}]
  %s2 = inlined_call_operand.vmem [shape: f32[16,16], index: 2, kind: input, shape index: {}]
  %s3 = inlined_call_operand.vmem [shape: f32[1,16], index: 3, kind: input, shape index: {}]
  %s4 = inlined_call_operand.vmem [shape: f32[16,128], index: 4, kind: input, shape index: {}]
  %s5 = inlined_call_operand.vmem [shape: f32[1,128], index: 5, kind: input, shape index: {}]
  %s6 = inlined_call_operand.vmem [shape: f32[16,128], index: 6, kind: input, shape index: {}]
  %s7 = inlined_call_operand.vmem [shape: f32[16,128], index: 7, kind: input, shape index: {}]
  %s8 = inlined_call_operand.hbm [shape: f32[2048,128], index: 8, kind: input, shape index: {}]
  %s9 = inlined_call_operand.vmem [shape: f32[1,128], index: 9, kind: input, shape index: {}]
  %s10 = inlined_call_operand.hbm [shape: f32[16,128], index: 10, kind: output, shape index: {0}]
  %s11 = inlined_call_operand.hbm [shape: f32[16,128], index: 11, kind: output, shape index: {1}]
  %12 = xla_tuple %s10, %s11
  %s13 = sld [smem:[#allocation0]]
  $region85: #{tpu_custom_call.1} parent=0
    _
  %s15 = ssub.s32 1, %s13
  %s16 = scalar_select 0, %s15, %s13
  %17 = sst [smem:[#allocation2]] %s0
  $region1: #{tpu_custom_call.1} parent=0
    #allocation3 [shape = 'u8[1048576]{0}', space=vmem, size = 0x100000, scoped, tag = 'input window, operand 8, single buffered']
    #allocation4 [shape = 's32[2]{0}', space=sflag, size = 0x8, scoped, tag = 'scoped memory for tpu_custom_call.1']
    #allocation5 [shape = 's32[2]{0}', space=sflag, size = 0x8, scoped, tag = 'scoped memory for tpu_custom_call.1']
    #allocation6 [shape = 'u8[8192]{0}', space=vmem, size = 0x2000, scoped, tag = 'output window, operand 0']
    #allocation7 [shape = 'u8[8192]{0}', space=vmem, size = 0x2000, scoped, tag = 'output window, operand 1']
    #allocation8 [shape = 's32[2]{0}', space=sflag, size = 0x8, scoped, tag = 'scoped memory for tpu_custom_call.1']
    %18 = vsyncpa [#allocation4], 0
    %19 = vsyncpa [#allocation5], 0
    %s20 = scalar_lea.sflag [#allocation5], 1
    %21 = vsyncpa %s20, 0
    %22 = vsyncpa [#allocation8], 0
    %s23 = scalar_lea.sflag [#allocation8], 1
    %24 = vsyncpa %s23, 0
    loop: start=0, step=1, limit=4
    $region2: #{tpu_custom_call.1} parent=1 // loop_pre_header
      _
    $region3: #{tpu_custom_call.1} parent=1 // loop_header
      %s26 = sphi 0, %s30
      %p27 = scmp.ge.s32.totalorder %s26, 4
      %s34 = sphi 0, %s34
      %s36 = sphi 0, %s34
      %s37 = sphi 0, %s36
      %s51 = sphi 0, %s37
      %s57 = sphi 0, %s59
      %s60 = sphi 0, %s57
      %s61 = sphi 0, %s60
      %s77 = sphi 0, %s61
      %s81 = sphi 0, %s81
      %s83 = sphi 0, %s81
      %s84 = sphi 0, %s83
      %s98 = sphi 0, %s84
      %s102 = sphi 0, %s102
      %s104 = sphi 0, %s102
      %s105 = sphi 0, %s104
      %s119 = sphi 0, %s105
      %s123 = sphi 0, %s123
      %s125 = sphi 0, %s123
      %s126 = sphi 0, %s125
      %s140 = sphi 0, %s126
      %s144 = sphi 0, %s144
      %s146 = sphi 0, %s144
      %s147 = sphi 0, %s146
      %s161 = sphi 0, %s147
      %s165 = sphi 0, %s165
      %s167 = sphi 0, %s165
      %s168 = sphi 0, %s167
      %s182 = sphi 0, %s168
      %s186 = sphi 0, %s186
      %s188 = sphi 0, %s186
      %s189 = sphi 0, %s188
      %s203 = sphi 0, %s189
      %s207 = sphi 0, %s207
      %s209 = sphi 0, %s207
      %s210 = sphi 0, %s209
      %s224 = sphi 0, %s210
      %s228 = sphi 0, %s228
      %s230 = sphi 0, %s228
      %s231 = sphi 0, %s230
      %s245 = sphi 0, %s231
      %s251 = sphi 0, %s253
      %s254 = sphi 0, %s251
      %s255 = sphi 0, %s254
      %s271 = sphi 0, %s255
      %s277 = sphi 0, %s279
      %s280 = sphi 0, %s277
      %s281 = sphi 0, %s280
      %s297 = sphi 0, %s281
    $region4: #{tpu_custom_call.1} parent=1 // loop_header_branch
      %29 = sbr.rel (%p27) target = $region8
    $region5: #{tpu_custom_call.1} parent=1 // loop_body
      %s31 = ssub.s32 %s26, 1
      %s32 = ssub.s32 %s26, 2
      %s33 = sadd.s32 %s26, 1
      %s35 = sadd.s32 %s34, 1
      %p38 = scmp.eq.s32.totalorder %s26, 1
      %p39 = scmp.ne.s32.totalorder %s34, %s36
      %p40 = scmp.eq.s32.totalorder %s26, 0
      %p41 = por %p39, %p40
      %p42 = scmp.ne.s32.totalorder %s34, %s36
      %p43 = scmp.eq.s32.totalorder %s31, 1
      %p44 = por %p42, %p43
      %p45 = scmp.ne.s32.totalorder %s36, %s37
      %p46 = scmp.eq.s32.totalorder %s31, 0
      %p47 = por %p45, %p46
      %p48 = scmp.ne.s32.totalorder %s36, %s37
      %p49 = scmp.eq.s32.totalorder %s32, 1
      %p50 = por %p48, %p49
      %p52 = scmp.ne.s32.totalorder %s37, %s51
      %p53 = scmp.eq.s32.totalorder %s32, 0
      %p54 = por %p52, %p53
      %s55 = ssub.s32 %s26, %s33
      %p56 = scmp.eq.s32.totalorder %s55, 0
      %s58 = sadd.s32 %s57, 1
      %s59 = scalar_select %p56, %s57, %s58
      %p62 = pneg %p56
      %p63 = scmp.eq.s32.totalorder %s26, 1
      %p64 = por %p62, %p63
      %p65 = scmp.ne.s32.totalorder %s57, %s60
      %p66 = scmp.eq.s32.totalorder %s26, 0
      %p67 = por %p65, %p66
      %p68 = scmp.ne.s32.totalorder %s57, %s60
      %p69 = scmp.eq.s32.totalorder %s31, 1
      %p70 = por %p68, %p69
      %p71 = scmp.ne.s32.totalorder %s60, %s61
      %p72 = scmp.eq.s32.totalorder %s31, 0
      %p73 = por %p71, %p72
      %p74 = scmp.ne.s32.totalorder %s60, %s61
      %p75 = scmp.eq.s32.totalorder %s32, 1
      %p76 = por %p74, %p75
      %p78 = scmp.ne.s32.totalorder %s61, %s77
      %p79 = scmp.eq.s32.totalorder %s32, 0
      %p80 = por %p78, %p79
      %s82 = sadd.s32 %s81, 1
      %p85 = scmp.eq.s32.totalorder %s26, 1
      %p86 = scmp.ne.s32.totalorder %s81, %s83
      %p87 = scmp.eq.s32.totalorder %s26, 0
      %p88 = por %p86, %p87
      %p89 = scmp.ne.s32.totalorder %s81, %s83
      %p90 = scmp.eq.s32.totalorder %s31, 1
      %p91 = por %p89, %p90
      %p92 = scmp.ne.s32.totalorder %s83, %s84
      %p93 = scmp.eq.s32.totalorder %s31, 0
      %p94 = por %p92, %p93
      %p95 = scmp.ne.s32.totalorder %s83, %s84
      %p96 = scmp.eq.s32.totalorder %s32, 1
      %p97 = por %p95, %p96
      %p99 = scmp.ne.s32.totalorder %s84, %s98
      %p100 = scmp.eq.s32.totalorder %s32, 0
      %p101 = por %p99, %p100
      %s103 = sadd.s32 %s102, 1
      %p106 = scmp.eq.s32.totalorder %s26, 1
      %p107 = scmp.ne.s32.totalorder %s102, %s104
      %p108 = scmp.eq.s32.totalorder %s26, 0
      %p109 = por %p107, %p108
      %p110 = scmp.ne.s32.totalorder %s102, %s104
      %p111 = scmp.eq.s32.totalorder %s31, 1
      %p112 = por %p110, %p111
      %p113 = scmp.ne.s32.totalorder %s104, %s105
      %p114 = scmp.eq.s32.totalorder %s31, 0
      %p115 = por %p113, %p114
      %p116 = scmp.ne.s32.totalorder %s104, %s105
      %p117 = scmp.eq.s32.totalorder %s32, 1
      %p118 = por %p116, %p117
      %p120 = scmp.ne.s32.totalorder %s105, %s119
      %p121 = scmp.eq.s32.totalorder %s32, 0
      %p122 = por %p120, %p121
      %s124 = sadd.s32 %s123, 1
      %p127 = scmp.eq.s32.totalorder %s26, 1
      %p128 = scmp.ne.s32.totalorder %s123, %s125
      %p129 = scmp.eq.s32.totalorder %s26, 0
      %p130 = por %p128, %p129
      %p131 = scmp.ne.s32.totalorder %s123, %s125
      %p132 = scmp.eq.s32.totalorder %s31, 1
      %p133 = por %p131, %p132
      %p134 = scmp.ne.s32.totalorder %s125, %s126
      %p135 = scmp.eq.s32.totalorder %s31, 0
      %p136 = por %p134, %p135
      %p137 = scmp.ne.s32.totalorder %s125, %s126
      %p138 = scmp.eq.s32.totalorder %s32, 1
      %p139 = por %p137, %p138
      %p141 = scmp.ne.s32.totalorder %s126, %s140
      %p142 = scmp.eq.s32.totalorder %s32, 0
      %p143 = por %p141, %p142
      %s145 = sadd.s32 %s144, 1
      %p148 = scmp.eq.s32.totalorder %s26, 1
      %p149 = scmp.ne.s32.totalorder %s144, %s146
      %p150 = scmp.eq.s32.totalorder %s26, 0
      %p151 = por %p149, %p150
      %p152 = scmp.ne.s32.totalorder %s144, %s146
      %p153 = scmp.eq.s32.totalorder %s31, 1
      %p154 = por %p152, %p153
      %p155 = scmp.ne.s32.totalorder %s146, %s147
      %p156 = scmp.eq.s32.totalorder %s31, 0
      %p157 = por %p155, %p156
      %p158 = scmp.ne.s32.totalorder %s146, %s147
      %p159 = scmp.eq.s32.totalorder %s32, 1
      %p160 = por %p158, %p159
      %p162 = scmp.ne.s32.totalorder %s147, %s161
      %p163 = scmp.eq.s32.totalorder %s32, 0
      %p164 = por %p162, %p163
      %s166 = sadd.s32 %s165, 1
      %p169 = scmp.eq.s32.totalorder %s26, 1
      %p170 = scmp.ne.s32.totalorder %s165, %s167
      %p171 = scmp.eq.s32.totalorder %s26, 0
      %p172 = por %p170, %p171
      %p173 = scmp.ne.s32.totalorder %s165, %s167
      %p174 = scmp.eq.s32.totalorder %s31, 1
      %p175 = por %p173, %p174
      %p176 = scmp.ne.s32.totalorder %s167, %s168
      %p177 = scmp.eq.s32.totalorder %s31, 0
      %p178 = por %p176, %p177
      %p179 = scmp.ne.s32.totalorder %s167, %s168
      %p180 = scmp.eq.s32.totalorder %s32, 1
      %p181 = por %p179, %p180
      %p183 = scmp.ne.s32.totalorder %s168, %s182
      %p184 = scmp.eq.s32.totalorder %s32, 0
      %p185 = por %p183, %p184
      %s187 = sadd.s32 %s186, 1
      %p190 = scmp.eq.s32.totalorder %s26, 1
      %p191 = scmp.ne.s32.totalorder %s186, %s188
      %p192 = scmp.eq.s32.totalorder %s26, 0
      %p193 = por %p191, %p192
      %p194 = scmp.ne.s32.totalorder %s186, %s188
      %p195 = scmp.eq.s32.totalorder %s31, 1
      %p196 = por %p194, %p195
      %p197 = scmp.ne.s32.totalorder %s188, %s189
      %p198 = scmp.eq.s32.totalorder %s31, 0
      %p199 = por %p197, %p198
      %p200 = scmp.ne.s32.totalorder %s188, %s189
      %p201 = scmp.eq.s32.totalorder %s32, 1
      %p202 = por %p200, %p201
      %p204 = scmp.ne.s32.totalorder %s189, %s203
      %p205 = scmp.eq.s32.totalorder %s32, 0
      %p206 = por %p204, %p205
      %s208 = sadd.s32 %s207, 1
      %p211 = scmp.eq.s32.totalorder %s26, 1
      %p212 = scmp.ne.s32.totalorder %s207, %s209
      %p213 = scmp.eq.s32.totalorder %s26, 0
      %p214 = por %p212, %p213
      %p215 = scmp.ne.s32.totalorder %s207, %s209
      %p216 = scmp.eq.s32.totalorder %s31, 1
      %p217 = por %p215, %p216
      %p218 = scmp.ne.s32.totalorder %s209, %s210
      %p219 = scmp.eq.s32.totalorder %s31, 0
      %p220 = por %p218, %p219
      %p221 = scmp.ne.s32.totalorder %s209, %s210
      %p222 = scmp.eq.s32.totalorder %s32, 1
      %p223 = por %p221, %p222
      %p225 = scmp.ne.s32.totalorder %s210, %s224
      %p226 = scmp.eq.s32.totalorder %s32, 0
      %p227 = por %p225, %p226
      %s229 = sadd.s32 %s228, 1
      %p232 = scmp.eq.s32.totalorder %s26, 1
      %p233 = scmp.ne.s32.totalorder %s228, %s230
      %p234 = scmp.eq.s32.totalorder %s26, 0
      %p235 = por %p233, %p234
      %p236 = scmp.ne.s32.totalorder %s228, %s230
      %p237 = scmp.eq.s32.totalorder %s31, 1
      %p238 = por %p236, %p237
      %p239 = scmp.ne.s32.totalorder %s230, %s231
      %p240 = scmp.eq.s32.totalorder %s31, 0
      %p241 = por %p239, %p240
      %p242 = scmp.ne.s32.totalorder %s230, %s231
      %p243 = scmp.eq.s32.totalorder %s32, 1
      %p244 = por %p242, %p243
      %p246 = scmp.ne.s32.totalorder %s231, %s245
      %p247 = scmp.eq.s32.totalorder %s32, 0
      %p248 = por %p246, %p247
      %s249 = ssub.s32 %s26, %s33
      %p250 = scmp.eq.s32.totalorder %s249, 0
      %s252 = sadd.s32 %s251, 1
      %s253 = scalar_select %p250, %s251, %s252
      %p256 = pneg %p250
      %p257 = scmp.eq.s32.totalorder %s26, 1
      %p258 = por %p256, %p257
      %p259 = scmp.ne.s32.totalorder %s251, %s254
      %p260 = scmp.eq.s32.totalorder %s26, 0
      %p261 = por %p259, %p260
      %p262 = scmp.ne.s32.totalorder %s251, %s254
      %p263 = scmp.eq.s32.totalorder %s31, 1
      %p264 = por %p262, %p263
      %p265 = scmp.ne.s32.totalorder %s254, %s255
      %p266 = scmp.eq.s32.totalorder %s31, 0
      %p267 = por %p265, %p266
      %p268 = scmp.ne.s32.totalorder %s254, %s255
      %p269 = scmp.eq.s32.totalorder %s32, 1
      %p270 = por %p268, %p269
      %p272 = scmp.ne.s32.totalorder %s255, %s271
      %p273 = scmp.eq.s32.totalorder %s32, 0
      %p274 = por %p272, %p273
      %s275 = ssub.s32 %s26, %s33
      %p276 = scmp.eq.s32.totalorder %s275, 0
      %s278 = sadd.s32 %s277, 1
      %s279 = scalar_select %p276, %s277, %s278
      %p282 = pneg %p276
      %p283 = scmp.eq.s32.totalorder %s26, 1
      %p284 = por %p282, %p283
      %p285 = scmp.ne.s32.totalorder %s277, %s280
      %p286 = scmp.eq.s32.totalorder %s26, 0
      %p287 = por %p285, %p286
      %p288 = scmp.ne.s32.totalorder %s277, %s280
      %p289 = scmp.eq.s32.totalorder %s31, 1
      %p290 = por %p288, %p289
      %p291 = scmp.ne.s32.totalorder %s280, %s281
      %p292 = scmp.eq.s32.totalorder %s31, 0
      %p293 = por %p291, %p292
      %p294 = scmp.ne.s32.totalorder %s280, %s281
      %p295 = scmp.eq.s32.totalorder %s32, 1
      %p296 = por %p294, %p295
      %p298 = scmp.ne.s32.totalorder %s281, %s297
      %p299 = scmp.eq.s32.totalorder %s32, 0
      %p300 = por %p298, %p299
      %p301 = scmp.le.s32.totalorder 1, %s26
      %p302 = scmp.lt.s32.totalorder %s26, 3
      %p303 = pnand %p301, %p302
      %p304 = pneg %p303
      // Predicated region
      $region9: #{tpu_custom_call.1} parent=5 // pred_check
        _
      $region10: #{tpu_custom_call.1} parent=5 // pred_check_branch
        %306 = sbr.rel (%p303) target = $region12
      $region11: #{tpu_custom_call.1} parent=5 // pred_region
        %s307 = ssub.s32 %s26, 1
        // Predicated region
        $region13: #{tpu_custom_call.1} parent=11 // pred_check
          %p308 = pneg %p47
        $region14: #{tpu_custom_call.1} parent=11 // pred_check_branch
          %310 = sbr.rel (%p308) target = $region16
        $region15: #{tpu_custom_call.1} parent=11 // pred_region
          _
        $region16: #{tpu_custom_call.1} parent=11 // pred_fallthru
          _
        // Predicated region
        $region17: #{tpu_custom_call.1} parent=11 // pred_check
          %p311 = pneg %p94
        $region18: #{tpu_custom_call.1} parent=11 // pred_check_branch
          %313 = sbr.rel (%p311) target = $region20
        $region19: #{tpu_custom_call.1} parent=11 // pred_region
          _
        $region20: #{tpu_custom_call.1} parent=11 // pred_fallthru
          _
        // Predicated region
        $region21: #{tpu_custom_call.1} parent=11 // pred_check
          %p314 = pneg %p115
        $region22: #{tpu_custom_call.1} parent=11 // pred_check_branch
          %316 = sbr.rel (%p314) target = $region24
        $region23: #{tpu_custom_call.1} parent=11 // pred_region
          _
        $region24: #{tpu_custom_call.1} parent=11 // pred_fallthru
          _
        // Predicated region
        $region25: #{tpu_custom_call.1} parent=11 // pred_check
          %p317 = pneg %p136
        $region26: #{tpu_custom_call.1} parent=11 // pred_check_branch
          %319 = sbr.rel (%p317) target = $region28
        $region27: #{tpu_custom_call.1} parent=11 // pred_region
          _
        $region28: #{tpu_custom_call.1} parent=11 // pred_fallthru
          _
        // Predicated region
        $region29: #{tpu_custom_call.1} parent=11 // pred_check
          %p320 = pneg %p157
        $region30: #{tpu_custom_call.1} parent=11 // pred_check_branch
          %322 = sbr.rel (%p320) target = $region32
        $region31: #{tpu_custom_call.1} parent=11 // pred_region
          _
        $region32: #{tpu_custom_call.1} parent=11 // pred_fallthru
          _
        // Predicated region
        $region33: #{tpu_custom_call.1} parent=11 // pred_check
          %p323 = pneg %p178
        $region34: #{tpu_custom_call.1} parent=11 // pred_check_branch
          %325 = sbr.rel (%p323) target = $region36
        $region35: #{tpu_custom_call.1} parent=11 // pred_region
          _
        $region36: #{tpu_custom_call.1} parent=11 // pred_fallthru
          _
        // Predicated region
        $region37: #{tpu_custom_call.1} parent=11 // pred_check
          %p326 = pneg %p199
        $region38: #{tpu_custom_call.1} parent=11 // pred_check_branch
          %328 = sbr.rel (%p326) target = $region40
        $region39: #{tpu_custom_call.1} parent=11 // pred_region
          _
        $region40: #{tpu_custom_call.1} parent=11 // pred_fallthru
          _
        // Predicated region
        $region41: #{tpu_custom_call.1} parent=11 // pred_check
          %p329 = pneg %p220
        $region42: #{tpu_custom_call.1} parent=11 // pred_check_branch
          %331 = sbr.rel (%p329) target = $region44
        $region43: #{tpu_custom_call.1} parent=11 // pred_region
          %s333 = ssub.s32 32768, 32768
          %334 = vsyncadd [#allocation4], %s333
          %s335 = sshll.u32 [#allocation3], 4
          %s336 = int_to_ptr.vmem [resolvable:$true] %s335
          %341 = dma.hbm_to_vmem [thread:$0]  %s8, 32768, %s336, [#allocation4], 128, 128, 8
        $region44: #{tpu_custom_call.1} parent=11 // pred_fallthru
          _
        // Predicated region
        $region45: #{tpu_custom_call.1} parent=11 // pred_check
          %p342 = pneg %p241
        $region46: #{tpu_custom_call.1} parent=11 // pred_check_branch
          %344 = sbr.rel (%p342) target = $region48
        $region47: #{tpu_custom_call.1} parent=11 // pred_region
          _
        $region48: #{tpu_custom_call.1} parent=11 // pred_fallthru
          _
      $region12: #{tpu_custom_call.1} parent=5 // pred_fallthru
        _
      %p345 = scmp.lt.s32.totalorder %s26, 2
      // Predicated region
      $region49: #{tpu_custom_call.1} parent=5 // pred_check
        %p346 = pneg %p345
      $region50: #{tpu_custom_call.1} parent=5 // pred_check_branch
        %348 = sbr.rel (%p346) target = $region52
      $region51: #{tpu_custom_call.1} parent=5 // pred_region
        // Predicated region
        $region53: #{tpu_custom_call.1} parent=51 // pred_check
          %p349 = pneg %p67
        $region54: #{tpu_custom_call.1} parent=51 // pred_check_branch
          %351 = sbr.rel (%p349) target = $region56
        $region55: #{tpu_custom_call.1} parent=51 // pred_region
          %s352 = smul.u32 16, %s26
          %p353 = scmp.lt.s32.totalorder %s352, 31
          %s354 = scalar_select %p353, %s352, 31
          %s355 = smul.addr %s354, 8
          %s356 = scalar_lea.vmem %s1, %s355
          %s357 = smul.u32 16, %s26
        $region56: #{tpu_custom_call.1} parent=51 // pred_fallthru
          _
      $region52: #{tpu_custom_call.1} parent=5 // pred_fallthru
        _
      %p358 = scmp.le.s32.totalorder 1, %s26
      %p359 = scmp.lt.s32.totalorder %s26, 3
      %p360 = pnand %p358, %p359
      %p361 = pneg %p360
      // Predicated region
      $region57: #{tpu_custom_call.1} parent=5 // pred_check
        _
      $region58: #{tpu_custom_call.1} parent=5 // pred_check_branch
        %363 = sbr.rel (%p360) target = $region60
      $region59: #{tpu_custom_call.1} parent=5 // pred_region
        %s364 = ssub.s32 %s26, 1
        // Predicated region
        $region61: #{tpu_custom_call.1} parent=59 // pred_check
          %p365 = pneg %p220
        $region62: #{tpu_custom_call.1} parent=59 // pred_check_branch
          %367 = sbr.rel (%p365) target = $region64
        $region63: #{tpu_custom_call.1} parent=59 // pred_region
          %368 = dma.done [#allocation4], 32768
        $region64: #{tpu_custom_call.1} parent=59 // pred_fallthru
          _
        %p369 = pneg %p47
        %p370 = pneg %p44
        %s371 = smul.u32 16, %s31
        %p372 = scmp.lt.s32.totalorder %s371, 31
        %s373 = scalar_select %p372, %s371, 31
        %s374 = smul.addr %s373, 8
        %s375 = scalar_lea.vmem %s1, %s374
        %p376 = pneg %p73
        %p377 = pneg %p70
        %p378 = pneg %p94
        %p379 = pneg %p91
        %p380 = pneg %p115
        %p381 = pneg %p112
        %p382 = pneg %p136
        %p383 = pneg %p133
        %p384 = pneg %p157
        %p385 = pneg %p154
        %p386 = pneg %p178
        %p387 = pneg %p175
        %p388 = pneg %p199
        %p389 = pneg %p196
        %p390 = pneg %p220
        %p391 = pneg %p217
        %p392 = pneg %p241
        %p393 = pneg %p238
        %p394 = pneg %p267
        %p395 = pneg %p264
        %s396 = sand.u32 %s254, 1
        %s397 = scalar_lea.sflag [#allocation5], %s396
        %s398 = sand.u32 %s254, 1
        %s399 = smul.addr %s398, 8
        %s400 = scalar_lea.vmem [#allocation6], %s399
        %p401 = pneg %p293
        %p402 = pneg %p290
        %s403 = sand.u32 %s280, 1
        %s404 = scalar_lea.sflag [#allocation8], %s403
        %s405 = sand.u32 %s280, 1
        %s406 = smul.addr %s405, 8
        %s407 = scalar_lea.vmem [#allocation7], %s406
        %s408 = smul.u32 16, %s31
        %p409 = scmp.lt.s32.totalorder %s408, 31
        %s410 = scalar_select %p409, %s408, 31
        %s411 = smul.addr %s410, 8
        %s412 = scalar_lea.vmem %s1, %s411
        %s413 = smul.u32 16, %s31
        %v414 = vld [vmem:[%s412] sm:$0xff]
        %v415 = vld [vmem:[%s412 + $0x8] sm:$0xff]
        %v416 = vld [vmem:[%s412 + $0x10] sm:$0xff]
        %v417 = vld [vmem:[%s412 + $0x18] sm:$0xff]
        %v418 = vld [vmem:[%s412 + $0x20] sm:$0xff]
        %v419 = vld [vmem:[%s412 + $0x28] sm:$0xff]
        %v420 = vld [vmem:[%s412 + $0x30] sm:$0xff]
        %v421 = vld [vmem:[%s412 + $0x38] sm:$0xff]
        %v422 = vld [vmem:[%s412 + $0x40] sm:$0xff]
        %v423 = vld [vmem:[%s412 + $0x48] sm:$0xff]
        %v424 = vld [vmem:[%s412 + $0x50] sm:$0xff]
        %v425 = vld [vmem:[%s412 + $0x58] sm:$0xff]
        %v426 = vld [vmem:[%s412 + $0x60] sm:$0xff]
        %v427 = vld [vmem:[%s412 + $0x68] sm:$0xff]
        %v428 = vld [vmem:[%s412 + $0x70] sm:$0xff]
        %v429 = vld [vmem:[%s412 + $0x78] sm:$0xff]
        %v430 = vld [vmem:[%s2] sm:$0xff]
        %v431 = vld [vmem:[%s2 + $0x8] sm:$0xff]
        %v432 = vld [vmem:[%s3] sm:$0x1]
        %v434 = vlaneseq
        %v435 = vshrl.u32 %v434, 7
        %v436 = vsub.s32 0, %v435
        %v437 = vrot.slane %v432, %v436
        %vm439 = vcmask 130048
        %v441 = vsel %vm439, %v414, 0
        %v444 = vsel %vm439, %v415, 0
        %v447 = vsel %vm439, %v416, 0
        %v450 = vsel %vm439, %v417, 0
        %v453 = vsel %vm439, %v418, 0
        %v456 = vsel %vm439, %v419, 0
        %v459 = vsel %vm439, %v420, 0
        %v462 = vsel %vm439, %v421, 0
        %v465 = vsel %vm439, %v422, 0
        %v468 = vsel %vm439, %v423, 0
        %v471 = vsel %vm439, %v424, 0
        %v474 = vsel %vm439, %v425, 0
        %v477 = vsel %vm439, %v426, 0
        %v480 = vsel %vm439, %v427, 0
        %v483 = vsel %vm439, %v428, 0
        %v486 = vsel %vm439, %v429, 0
        %488 = vmatprep.subr.mxu0 0.0
        %489 = vmatpush1.msra.mxu0 %v430
        %490 = vmatprep.subr.mxu0 0.0
        %491 = vmatpush1.msra.mxu0 %v431
        %492 = vmatprep.subr.mxu0 0.0
        %493 = vmatpush1.msra.mxu0 0.0
        %494 = vmatprep.subr.mxu0 0.0
        %495 = vmatpush1.msra.mxu0 0.0
        %496 = vmatprep.subr.mxu0 0.0
        %497 = vmatpush1.msra.mxu0 0.0
        %498 = vmatprep.subr.mxu0 0.0
        %499 = vmatpush1.msra.mxu0 0.0
        %500 = vmatprep.subr.mxu0 0.0
        %501 = vmatpush1.msra.mxu0 0.0
        %502 = vmatprep.subr.mxu0 0.0
        %503 = vmatpush1.msra.mxu0 0.0
        %504 = vmatprep.subr.mxu0 0.0
        %505 = vmatpush1.msra.mxu0 0.0
        %506 = vmatprep.subr.mxu0 0.0
        %507 = vmatpush1.msra.mxu0 0.0
        %508 = vmatprep.subr.mxu0 0.0
        %509 = vmatpush1.msra.mxu0 0.0
        %510 = vmatprep.subr.mxu0 0.0
        %511 = vmatpush1.msra.mxu0 0.0
        %512 = vmatprep.subr.mxu0 0.0
        %513 = vmatpush1.msra.mxu0 0.0
        %514 = vmatprep.subr.mxu0 0.0
        %515 = vmatpush1.msra.mxu0 0.0
        %516 = vmatprep.subr.mxu0 0.0
        %517 = vmatpush1.msra.mxu0 0.0
        %518 = vmatprep.subr.mxu0 0.0
        %519 = vmatpush1.msra.mxu0 0.0
        %520 = vmatprep.subr.mxu0 0.0
        %521 = vmatpush1.msra.mxu0 0.0
        %522 = vmatprep.subr.mxu0 0.0
        %523 = vmatpush1.msra.mxu0 0.0
        %524 = vmatprep.subr.mxu0 0.0
        %525 = vmatpush1.msra.mxu0 0.0
        %526 = vmatprep.subr.mxu0 0.0
        %527 = vmatpush1.msra.mxu0 0.0
        %528 = vmatprep.subr.mxu0 0.0
        %529 = vmatpush1.msra.mxu0 0.0
        %530 = vmatprep.subr.mxu0 0.0
        %531 = vmatpush1.msra.mxu0 0.0
        %532 = vmatprep.subr.mxu0 0.0
        %533 = vmatpush1.msra.mxu0 0.0
        %534 = vmatprep.subr.mxu0 0.0
        %535 = vmatpush1.msra.mxu0 0.0
        %536 = vmatprep.subr.mxu0 0.0
        %537 = vmatpush1.msra.mxu0 0.0
        %538 = vmatprep.subr.mxu0 0.0
        %539 = vmatpush1.msra.mxu0 0.0
        %540 = vmatprep.subr.mxu0 0.0
        %541 = vmatpush1.msra.mxu0 0.0
        %542 = vmatprep.subr.mxu0 0.0
        %543 = vmatpush1.msra.mxu0 0.0
        %544 = vmatprep.subr.mxu0 0.0
        %545 = vmatpush1.msra.mxu0 0.0
        %546 = vmatprep.subr.mxu0 0.0
        %547 = vmatpush1.msra.mxu0 0.0
        %548 = vmatprep.subr.mxu0 0.0
        %549 = vmatpush1.msra.mxu0 0.0
        %550 = vmatprep.subr.mxu0 0.0
        %551 = vmatpush1.msra.mxu0 0.0
        %552 = vmatprep.mubr.f32.mxu0 0.0
        %553 = vmatmul.mubr.f32.gmra.mrb[0].mxu0 %v441
        %v554 = vpop.f32.mrb[0].mxu0
        %v555 = vadd.f32 %v437, %v554
        %v556 = vpop.f32.mrb[0].mxu0
        %557 = vmatprep.mubr.f32.mxu0 0.0
        %558 = vmatmul.mubr.f32.gmra.mrb[0].mxu0 %v444
        %v559 = vpop.f32.mrb[0].mxu0
        %v560 = vadd.f32 %v437, %v559
        %v561 = vpop.f32.mrb[0].mxu0
        %562 = vmatprep.mubr.f32.mxu0 0.0
        %563 = vmatmul.mubr.f32.gmra.mrb[0].mxu0 %v447
        %v564 = vpop.f32.mrb[0].mxu0
        %v565 = vadd.f32 %v437, %v564
        %v566 = vpop.f32.mrb[0].mxu0
        %567 = vmatprep.mubr.f32.mxu0 0.0
        %568 = vmatmul.mubr.f32.gmra.mrb[0].mxu0 %v450
        %v569 = vpop.f32.mrb[0].mxu0
        %v570 = vadd.f32 %v437, %v569
        %v571 = vpop.f32.mrb[0].mxu0
        %572 = vmatprep.mubr.f32.mxu0 0.0
        %573 = vmatmul.mubr.f32.gmra.mrb[0].mxu0 %v453
        %v574 = vpop.f32.mrb[0].mxu0
        %v575 = vadd.f32 %v437, %v574
        %v576 = vpop.f32.mrb[0].mxu0
        %577 = vmatprep.mubr.f32.mxu0 0.0
        %578 = vmatmul.mubr.f32.gmra.mrb[0].mxu0 %v456
        %v579 = vpop.f32.mrb[0].mxu0
        %v580 = vadd.f32 %v437, %v579
        %v581 = vpop.f32.mrb[0].mxu0
        %582 = vmatprep.mubr.f32.mxu0 0.0
        %583 = vmatmul.mubr.f32.gmra.mrb[0].mxu0 %v459
        %v584 = vpop.f32.mrb[0].mxu0
        %v585 = vadd.f32 %v437, %v584
        %v586 = vpop.f32.mrb[0].mxu0
        %587 = vmatprep.mubr.f32.mxu0 0.0
        %588 = vmatmul.mubr.f32.gmra.mrb[0].mxu0 %v462
        %v589 = vpop.f32.mrb[0].mxu0
        %v590 = vadd.f32 %v437, %v589
        %v591 = vpop.f32.mrb[0].mxu0
        %592 = vmatprep.mubr.f32.mxu0 0.0
        %593 = vmatmul.mubr.f32.gmra.mrb[0].mxu0 %v465
        %v594 = vpop.f32.mrb[0].mxu0
        %v595 = vadd.f32 %v437, %v594
        %v596 = vpop.f32.mrb[0].mxu0
        %597 = vmatprep.mubr.f32.mxu0 0.0
        %598 = vmatmul.mubr.f32.gmra.mrb[0].mxu0 %v468
        %v599 = vpop.f32.mrb[0].mxu0
        %v600 = vadd.f32 %v437, %v599
        %v601 = vpop.f32.mrb[0].mxu0
        %602 = vmatprep.mubr.f32.mxu0 0.0
        %603 = vmatmul.mubr.f32.gmra.mrb[0].mxu0 %v471
        %v604 = vpop.f32.mrb[0].mxu0
        %v605 = vadd.f32 %v437, %v604
        %v606 = vpop.f32.mrb[0].mxu0
        %607 = vmatprep.mubr.f32.mxu0 0.0
        %608 = vmatmul.mubr.f32.gmra.mrb[0].mxu0 %v474
        %v609 = vpop.f32.mrb[0].mxu0
        %v610 = vadd.f32 %v437, %v609
        %v611 = vpop.f32.mrb[0].mxu0
        %612 = vmatprep.mubr.f32.mxu0 0.0
        %613 = vmatmul.mubr.f32.gmra.mrb[0].mxu0 %v477
        %v614 = vpop.f32.mrb[0].mxu0
        %v615 = vadd.f32 %v437, %v614
        %v616 = vpop.f32.mrb[0].mxu0
        %617 = vmatprep.mubr.f32.mxu0 0.0
        %618 = vmatmul.mubr.f32.gmra.mrb[0].mxu0 %v480
        %v619 = vpop.f32.mrb[0].mxu0
        %v620 = vadd.f32 %v437, %v619
        %v621 = vpop.f32.mrb[0].mxu0
        %622 = vmatprep.mubr.f32.mxu0 0.0
        %623 = vmatmul.mubr.f32.gmra.mrb[0].mxu0 %v483
        %v624 = vpop.f32.mrb[0].mxu0
        %v625 = vadd.f32 %v437, %v624
        %v626 = vpop.f32.mrb[0].mxu0
        %627 = vmatprep.mubr.f32.mxu0 0.0
        %628 = vmatmul.mubr.f32.gmra.mrb[0].mxu0 %v486
        %v629 = vpop.f32.mrb[0].mxu0
        %v630 = vadd.f32 %v437, %v629
        %v631 = vpop.f32.mrb[0].mxu0
        %632 = vdwg.mxu0
        %633 = vxpose.xlu0.b32.start [1/16] %v555, 128
        %634 = vxpose.xlu0.b32.cont [2/16] %v560, 128
        %635 = vxpose.xlu0.b32.cont [3/16] 0.0, 128
        %636 = vxpose.xlu0.b32.cont [4/16] 0.0, 128
        %637 = vxpose.xlu0.b32.cont [5/16] 0.0, 128
        %638 = vxpose.xlu0.b32.cont [6/16] 0.0, 128
        %639 = vxpose.xlu0.b32.cont [7/16] 0.0, 128
        %640 = vxpose.xlu0.b32.cont [8/16] 0.0, 128
        %641 = vxpose.xlu0.b32.cont [9/16] 0.0, 128
        %642 = vxpose.xlu0.b32.cont [10/16] 0.0, 128
        %643 = vxpose.xlu0.b32.cont [11/16] 0.0, 128
        %644 = vxpose.xlu0.b32.cont [12/16] 0.0, 128
        %645 = vxpose.xlu0.b32.cont [13/16] 0.0, 128
        %646 = vxpose.xlu0.b32.cont [14/16] 0.0, 128
        %647 = vxpose.xlu0.b32.cont [15/16] 0.0, 128
        %648 = vxpose.xlu0.b32.end [16/16] 0.0, 128
        %v649 = vpop.trf.xlu0
        %v650 = vpop.trf.xlu0
        %v651 = vpop.trf.xlu0
        %v652 = vpop.trf.xlu0
        %v653 = vpop.trf.xlu0
        %v654 = vpop.trf.xlu0
        %v655 = vpop.trf.xlu0
        %v656 = vpop.trf.xlu0
        %v657 = vpop.trf.xlu0
        %v658 = vpop.trf.xlu0
        %v659 = vpop.trf.xlu0
        %v660 = vpop.trf.xlu0
        %v661 = vpop.trf.xlu0
        %v662 = vpop.trf.xlu0
        %v663 = vpop.trf.xlu0
        %v664 = vpop.trf.xlu0
        %665 = vxpose.xlu0.b32.start [1/16] %v565, 128
        %666 = vxpose.xlu0.b32.cont [2/16] %v570, 128
        %667 = vxpose.xlu0.b32.cont [3/16] 0.0, 128
        %668 = vxpose.xlu0.b32.cont [4/16] 0.0, 128
        %669 = vxpose.xlu0.b32.cont [5/16] 0.0, 128
        %670 = vxpose.xlu0.b32.cont [6/16] 0.0, 128
        %671 = vxpose.xlu0.b32.cont [7/16] 0.0, 128
        %672 = vxpose.xlu0.b32.cont [8/16] 0.0, 128
        %673 = vxpose.xlu0.b32.cont [9/16] 0.0, 128
        %674 = vxpose.xlu0.b32.cont [10/16] 0.0, 128
        %675 = vxpose.xlu0.b32.cont [11/16] 0.0, 128
        %676 = vxpose.xlu0.b32.cont [12/16] 0.0, 128
        %677 = vxpose.xlu0.b32.cont [13/16] 0.0, 128
        %678 = vxpose.xlu0.b32.cont [14/16] 0.0, 128
        %679 = vxpose.xlu0.b32.cont [15/16] 0.0, 128
        %680 = vxpose.xlu0.b32.end [16/16] 0.0, 128
        %v681 = vpop.trf.xlu0
        %v682 = vpop.trf.xlu0
        %v683 = vpop.trf.xlu0
        %v684 = vpop.trf.xlu0
        %v685 = vpop.trf.xlu0
        %v686 = vpop.trf.xlu0
        %v687 = vpop.trf.xlu0
        %v688 = vpop.trf.xlu0
        %v689 = vpop.trf.xlu0
        %v690 = vpop.trf.xlu0
        %v691 = vpop.trf.xlu0
        %v692 = vpop.trf.xlu0
        %v693 = vpop.trf.xlu0
        %v694 = vpop.trf.xlu0
        %v695 = vpop.trf.xlu0
        %v696 = vpop.trf.xlu0
        %697 = vxpose.xlu0.b32.start [1/16] %v575, 128
        %698 = vxpose.xlu0.b32.cont [2/16] %v580, 128
        %699 = vxpose.xlu0.b32.cont [3/16] 0.0, 128
        %700 = vxpose.xlu0.b32.cont [4/16] 0.0, 128
        %701 = vxpose.xlu0.b32.cont [5/16] 0.0, 128
        %702 = vxpose.xlu0.b32.cont [6/16] 0.0, 128
        %703 = vxpose.xlu0.b32.cont [7/16] 0.0, 128
        %704 = vxpose.xlu0.b32.cont [8/16] 0.0, 128
        %705 = vxpose.xlu0.b32.cont [9/16] 0.0, 128
        %706 = vxpose.xlu0.b32.cont [10/16] 0.0, 128
        %707 = vxpose.xlu0.b32.cont [11/16] 0.0, 128
        %708 = vxpose.xlu0.b32.cont [12/16] 0.0, 128
        %709 = vxpose.xlu0.b32.cont [13/16] 0.0, 128
        %710 = vxpose.xlu0.b32.cont [14/16] 0.0, 128
        %711 = vxpose.xlu0.b32.cont [15/16] 0.0, 128
        %712 = vxpose.xlu0.b32.end [16/16] 0.0, 128
        %v713 = vpop.trf.xlu0
        %v714 = vpop.trf.xlu0
        %v715 = vpop.trf.xlu0
        %v716 = vpop.trf.xlu0
        %v717 = vpop.trf.xlu0
        %v718 = vpop.trf.xlu0
        %v719 = vpop.trf.xlu0
        %v720 = vpop.trf.xlu0
        %v721 = vpop.trf.xlu0
        %v722 = vpop.trf.xlu0
        %v723 = vpop.trf.xlu0
        %v724 = vpop.trf.xlu0
        %v725 = vpop.trf.xlu0
        %v726 = vpop.trf.xlu0
        %v727 = vpop.trf.xlu0
        %v728 = vpop.trf.xlu0
        %729 = vxpose.xlu0.b32.start [1/16] %v585, 128
        %730 = vxpose.xlu0.b32.cont [2/16] %v590, 128
        %731 = vxpose.xlu0.b32.cont [3/16] 0.0, 128
        %732 = vxpose.xlu0.b32.cont [4/16] 0.0, 128
        %733 = vxpose.xlu0.b32.cont [5/16] 0.0, 128
        %734 = vxpose.xlu0.b32.cont [6/16] 0.0, 128
        %735 = vxpose.xlu0.b32.cont [7/16] 0.0, 128
        %736 = vxpose.xlu0.b32.cont [8/16] 0.0, 128
        %737 = vxpose.xlu0.b32.cont [9/16] 0.0, 128
        %738 = vxpose.xlu0.b32.cont [10/16] 0.0, 128
        %739 = vxpose.xlu0.b32.cont [11/16] 0.0, 128
        %740 = vxpose.xlu0.b32.cont [12/16] 0.0, 128
        %741 = vxpose.xlu0.b32.cont [13/16] 0.0, 128
        %742 = vxpose.xlu0.b32.cont [14/16] 0.0, 128
        %743 = vxpose.xlu0.b32.cont [15/16] 0.0, 128
        %744 = vxpose.xlu0.b32.end [16/16] 0.0, 128
        %v745 = vpop.trf.xlu0
        %v746 = vpop.trf.xlu0
        %v747 = vpop.trf.xlu0
        %v748 = vpop.trf.xlu0
        %v749 = vpop.trf.xlu0
        %v750 = vpop.trf.xlu0
        %v751 = vpop.trf.xlu0
        %v752 = vpop.trf.xlu0
        %v753 = vpop.trf.xlu0
        %v754 = vpop.trf.xlu0
        %v755 = vpop.trf.xlu0
        %v756 = vpop.trf.xlu0
        %v757 = vpop.trf.xlu0
        %v758 = vpop.trf.xlu0
        %v759 = vpop.trf.xlu0
        %v760 = vpop.trf.xlu0
        %761 = vxpose.xlu0.b32.start [1/16] %v595, 128
        %762 = vxpose.xlu0.b32.cont [2/16] %v600, 128
        %763 = vxpose.xlu0.b32.cont [3/16] 0.0, 128
        %764 = vxpose.xlu0.b32.cont [4/16] 0.0, 128
        %765 = vxpose.xlu0.b32.cont [5/16] 0.0, 128
        %766 = vxpose.xlu0.b32.cont [6/16] 0.0, 128
        %767 = vxpose.xlu0.b32.cont [7/16] 0.0, 128
        %768 = vxpose.xlu0.b32.cont [8/16] 0.0, 128
        %769 = vxpose.xlu0.b32.cont [9/16] 0.0, 128
        %770 = vxpose.xlu0.b32.cont [10/16] 0.0, 128
        %771 = vxpose.xlu0.b32.cont [11/16] 0.0, 128
        %772 = vxpose.xlu0.b32.cont [12/16] 0.0, 128
        %773 = vxpose.xlu0.b32.cont [13/16] 0.0, 128
        %774 = vxpose.xlu0.b32.cont [14/16] 0.0, 128
        %775 = vxpose.xlu0.b32.cont [15/16] 0.0, 128
        %776 = vxpose.xlu0.b32.end [16/16] 0.0, 128
        %v777 = vpop.trf.xlu0
        %v778 = vpop.trf.xlu0
        %v779 = vpop.trf.xlu0
        %v780 = vpop.trf.xlu0
        %v781 = vpop.trf.xlu0
        %v782 = vpop.trf.xlu0
        %v783 = vpop.trf.xlu0
        %v784 = vpop.trf.xlu0
        %v785 = vpop.trf.xlu0
        %v786 = vpop.trf.xlu0
        %v787 = vpop.trf.xlu0
        %v788 = vpop.trf.xlu0
        %v789 = vpop.trf.xlu0
        %v790 = vpop.trf.xlu0
        %v791 = vpop.trf.xlu0
        %v792 = vpop.trf.xlu0
        %793 = vxpose.xlu0.b32.start [1/16] %v605, 128
        %794 = vxpose.xlu0.b32.cont [2/16] %v610, 128
        %795 = vxpose.xlu0.b32.cont [3/16] 0.0, 128
        %796 = vxpose.xlu0.b32.cont [4/16] 0.0, 128
        %797 = vxpose.xlu0.b32.cont [5/16] 0.0, 128
        %798 = vxpose.xlu0.b32.cont [6/16] 0.0, 128
        %799 = vxpose.xlu0.b32.cont [7/16] 0.0, 128
        %800 = vxpose.xlu0.b32.cont [8/16] 0.0, 128
        %801 = vxpose.xlu0.b32.cont [9/16] 0.0, 128
        %802 = vxpose.xlu0.b32.cont [10/16] 0.0, 128
        %803 = vxpose.xlu0.b32.cont [11/16] 0.0, 128
        %804 = vxpose.xlu0.b32.cont [12/16] 0.0, 128
        %805 = vxpose.xlu0.b32.cont [13/16] 0.0, 128
        %806 = vxpose.xlu0.b32.cont [14/16] 0.0, 128
        %807 = vxpose.xlu0.b32.cont [15/16] 0.0, 128
        %808 = vxpose.xlu0.b32.end [16/16] 0.0, 128
        %v809 = vpop.trf.xlu0
        %v810 = vpop.trf.xlu0
        %v811 = vpop.trf.xlu0
        %v812 = vpop.trf.xlu0
        %v813 = vpop.trf.xlu0
        %v814 = vpop.trf.xlu0
        %v815 = vpop.trf.xlu0
        %v816 = vpop.trf.xlu0
        %v817 = vpop.trf.xlu0
        %v818 = vpop.trf.xlu0
        %v819 = vpop.trf.xlu0
        %v820 = vpop.trf.xlu0
        %v821 = vpop.trf.xlu0
        %v822 = vpop.trf.xlu0
        %v823 = vpop.trf.xlu0
        %v824 = vpop.trf.xlu0
        %825 = vxpose.xlu0.b32.start [1/16] %v615, 128
        %826 = vxpose.xlu0.b32.cont [2/16] %v620, 128
        %827 = vxpose.xlu0.b32.cont [3/16] 0.0, 128
        %828 = vxpose.xlu0.b32.cont [4/16] 0.0, 128
        %829 = vxpose.xlu0.b32.cont [5/16] 0.0, 128
        %830 = vxpose.xlu0.b32.cont [6/16] 0.0, 128
        %831 = vxpose.xlu0.b32.cont [7/16] 0.0, 128
        %832 = vxpose.xlu0.b32.cont [8/16] 0.0, 128
        %833 = vxpose.xlu0.b32.cont [9/16] 0.0, 128
        %834 = vxpose.xlu0.b32.cont [10/16] 0.0, 128
        %835 = vxpose.xlu0.b32.cont [11/16] 0.0, 128
        %836 = vxpose.xlu0.b32.cont [12/16] 0.0, 128
        %837 = vxpose.xlu0.b32.cont [13/16] 0.0, 128
        %838 = vxpose.xlu0.b32.cont [14/16] 0.0, 128
        %839 = vxpose.xlu0.b32.cont [15/16] 0.0, 128
        %840 = vxpose.xlu0.b32.end [16/16] 0.0, 128
        %v841 = vpop.trf.xlu0
        %v842 = vpop.trf.xlu0
        %v843 = vpop.trf.xlu0
        %v844 = vpop.trf.xlu0
        %v845 = vpop.trf.xlu0
        %v846 = vpop.trf.xlu0
        %v847 = vpop.trf.xlu0
        %v848 = vpop.trf.xlu0
        %v849 = vpop.trf.xlu0
        %v850 = vpop.trf.xlu0
        %v851 = vpop.trf.xlu0
        %v852 = vpop.trf.xlu0
        %v853 = vpop.trf.xlu0
        %v854 = vpop.trf.xlu0
        %v855 = vpop.trf.xlu0
        %v856 = vpop.trf.xlu0
        %857 = vxpose.xlu0.b32.start [1/16] %v625, 128
        %858 = vxpose.xlu0.b32.cont [2/16] %v630, 128
        %859 = vxpose.xlu0.b32.cont [3/16] 0.0, 128
        %860 = vxpose.xlu0.b32.cont [4/16] 0.0, 128
        %861 = vxpose.xlu0.b32.cont [5/16] 0.0, 128
        %862 = vxpose.xlu0.b32.cont [6/16] 0.0, 128
        %863 = vxpose.xlu0.b32.cont [7/16] 0.0, 128
        %864 = vxpose.xlu0.b32.cont [8/16] 0.0, 128
        %865 = vxpose.xlu0.b32.cont [9/16] 0.0, 128
        %866 = vxpose.xlu0.b32.cont [10/16] 0.0, 128
        %867 = vxpose.xlu0.b32.cont [11/16] 0.0, 128
        %868 = vxpose.xlu0.b32.cont [12/16] 0.0, 128
        %869 = vxpose.xlu0.b32.cont [13/16] 0.0, 128
        %870 = vxpose.xlu0.b32.cont [14/16] 0.0, 128
        %871 = vxpose.xlu0.b32.cont [15/16] 0.0, 128
        %872 = vxpose.xlu0.b32.end [16/16] 0.0, 128
        %v873 = vpop.trf.xlu0
        %v874 = vpop.trf.xlu0
        %v875 = vpop.trf.xlu0
        %v876 = vpop.trf.xlu0
        %v877 = vpop.trf.xlu0
        %v878 = vpop.trf.xlu0
        %v879 = vpop.trf.xlu0
        %v880 = vpop.trf.xlu0
        %v881 = vpop.trf.xlu0
        %v882 = vpop.trf.xlu0
        %v883 = vpop.trf.xlu0
        %v884 = vpop.trf.xlu0
        %v885 = vpop.trf.xlu0
        %v886 = vpop.trf.xlu0
        %v887 = vpop.trf.xlu0
        %v888 = vpop.trf.xlu0
        %v889 = vld [vmem:[%s4] sm:$0xff]
        %v890 = vld [vmem:[%s4 + $0x8] sm:$0xff]
        %v891 = vld [vmem:[%s5] sm:$0x1]
        %v893 = vlaneseq
        %v894 = vshrl.u32 %v893, 7
        %v895 = vsub.s32 0, %v894
        %v896 = vrot.slane %v891, %v895
        %v899 = vsel %vm439, %v649, 0
        %v902 = vsel %vm439, %v650, 0
        %v905 = vsel %vm439, %v681, 0
        %v908 = vsel %vm439, %v682, 0
        %v911 = vsel %vm439, %v713, 0
        %v914 = vsel %vm439, %v714, 0
        %v917 = vsel %vm439, %v745, 0
        %v920 = vsel %vm439, %v746, 0
        %v923 = vsel %vm439, %v777, 0
        %v926 = vsel %vm439, %v778, 0
        %v929 = vsel %vm439, %v809, 0
        %v932 = vsel %vm439, %v810, 0
        %v935 = vsel %vm439, %v841, 0
        %v938 = vsel %vm439, %v842, 0
        %v941 = vsel %vm439, %v873, 0
        %v944 = vsel %vm439, %v874, 0
        %946 = vmatprep.subr.mxu0 0.0
        %947 = vmatpush1.msra.mxu0 %v889
        %948 = vmatprep.subr.mxu0 0.0
        %949 = vmatpush1.msra.mxu0 %v890
        %950 = vmatprep.subr.mxu0 0.0
        %951 = vmatpush1.msra.mxu0 0.0
        %952 = vmatprep.subr.mxu0 0.0
        %953 = vmatpush1.msra.mxu0 0.0
        %954 = vmatprep.subr.mxu0 0.0
        %955 = vmatpush1.msra.mxu0 0.0
        %956 = vmatprep.subr.mxu0 0.0
        %957 = vmatpush1.msra.mxu0 0.0
        %958 = vmatprep.subr.mxu0 0.0
        %959 = vmatpush1.msra.mxu0 0.0
        %960 = vmatprep.subr.mxu0 0.0
        %961 = vmatpush1.msra.mxu0 0.0
        %962 = vmatprep.subr.mxu0 0.0
        %963 = vmatpush1.msra.mxu0 0.0
        %964 = vmatprep.subr.mxu0 0.0
        %965 = vmatpush1.msra.mxu0 0.0
        %966 = vmatprep.subr.mxu0 0.0
        %967 = vmatpush1.msra.mxu0 0.0
        %968 = vmatprep.subr.mxu0 0.0
        %969 = vmatpush1.msra.mxu0 0.0
        %970 = vmatprep.subr.mxu0 0.0
        %971 = vmatpush1.msra.mxu0 0.0
        %972 = vmatprep.subr.mxu0 0.0
        %973 = vmatpush1.msra.mxu0 0.0
        %974 = vmatprep.subr.mxu0 0.0
        %975 = vmatpush1.msra.mxu0 0.0
        %976 = vmatprep.subr.mxu0 0.0
        %977 = vmatpush1.msra.mxu0 0.0
        %978 = vmatprep.subr.mxu0 0.0
        %979 = vmatpush1.msra.mxu0 0.0
        %980 = vmatprep.subr.mxu0 0.0
        %981 = vmatpush1.msra.mxu0 0.0
        %982 = vmatprep.subr.mxu0 0.0
        %983 = vmatpush1.msra.mxu0 0.0
        %984 = vmatprep.subr.mxu0 0.0
        %985 = vmatpush1.msra.mxu0 0.0
        %986 = vmatprep.subr.mxu0 0.0
        %987 = vmatpush1.msra.mxu0 0.0
        %988 = vmatprep.subr.mxu0 0.0
        %989 = vmatpush1.msra.mxu0 0.0
        %990 = vmatprep.subr.mxu0 0.0
        %991 = vmatpush1.msra.mxu0 0.0
        %992 = vmatprep.subr.mxu0 0.0
        %993 = vmatpush1.msra.mxu0 0.0
        %994 = vmatprep.subr.mxu0 0.0
        %995 = vmatpush1.msra.mxu0 0.0
        %996 = vmatprep.subr.mxu0 0.0
        %997 = vmatpush1.msra.mxu0 0.0
        %998 = vmatprep.subr.mxu0 0.0
        %999 = vmatpush1.msra.mxu0 0.0
        %1000 = vmatprep.subr.mxu0 0.0
        %1001 = vmatpush1.msra.mxu0 0.0
        %1002 = vmatprep.subr.mxu0 0.0
        %1003 = vmatpush1.msra.mxu0 0.0
        %1004 = vmatprep.subr.mxu0 0.0
        %1005 = vmatpush1.msra.mxu0 0.0
        %1006 = vmatprep.subr.mxu0 0.0
        %1007 = vmatpush1.msra.mxu0 0.0
        %1008 = vmatprep.subr.mxu0 0.0
        %1009 = vmatpush1.msra.mxu0 0.0
        %1010 = vmatprep.mubr.f32.mxu0 0.0
        %1011 = vmatmul.mubr.f32.gmra.mrb[0].mxu0 %v899
        %v1012 = vpop.f32.mrb[0].mxu0
        %v1013 = vadd.f32 %v896, %v1012
        %v1014 = vpop.f32.mrb[0].mxu0
        %1015 = vmatprep.mubr.f32.mxu0 0.0
        %1016 = vmatmul.mubr.f32.gmra.mrb[0].mxu0 %v902
        %v1017 = vpop.f32.mrb[0].mxu0
        %v1018 = vadd.f32 %v896, %v1017
        %v1019 = vpop.f32.mrb[0].mxu0
        %1020 = vmatprep.mubr.f32.mxu0 0.0
        %1021 = vmatmul.mubr.f32.gmra.mrb[0].mxu0 %v905
        %v1022 = vpop.f32.mrb[0].mxu0
        %v1023 = vadd.f32 %v896, %v1022
        %v1024 = vpop.f32.mrb[0].mxu0
        %1025 = vmatprep.mubr.f32.mxu0 0.0
        %1026 = vmatmul.mubr.f32.gmra.mrb[0].mxu0 %v908
        %v1027 = vpop.f32.mrb[0].mxu0
        %v1028 = vadd.f32 %v896, %v1027
        %v1029 = vpop.f32.mrb[0].mxu0
        %1030 = vmatprep.mubr.f32.mxu0 0.0
        %1031 = vmatmul.mubr.f32.gmra.mrb[0].mxu0 %v911
        %v1032 = vpop.f32.mrb[0].mxu0
        %v1033 = vadd.f32 %v896, %v1032
        %v1034 = vpop.f32.mrb[0].mxu0
        %1035 = vmatprep.mubr.f32.mxu0 0.0
        %1036 = vmatmul.mubr.f32.gmra.mrb[0].mxu0 %v914
        %v1037 = vpop.f32.mrb[0].mxu0
        %v1038 = vadd.f32 %v896, %v1037
        %v1039 = vpop.f32.mrb[0].mxu0
        %1040 = vmatprep.mubr.f32.mxu0 0.0
        %1041 = vmatmul.mubr.f32.gmra.mrb[0].mxu0 %v917
        %v1042 = vpop.f32.mrb[0].mxu0
        %v1043 = vadd.f32 %v896, %v1042
        %v1044 = vpop.f32.mrb[0].mxu0
        %1045 = vmatprep.mubr.f32.mxu0 0.0
        %1046 = vmatmul.mubr.f32.gmra.mrb[0].mxu0 %v920
        %v1047 = vpop.f32.mrb[0].mxu0
        %v1048 = vadd.f32 %v896, %v1047
        %v1049 = vpop.f32.mrb[0].mxu0
        %1050 = vmatprep.mubr.f32.mxu0 0.0
        %1051 = vmatmul.mubr.f32.gmra.mrb[0].mxu0 %v923
        %v1052 = vpop.f32.mrb[0].mxu0
        %v1053 = vadd.f32 %v896, %v1052
        %v1054 = vpop.f32.mrb[0].mxu0
        %1055 = vmatprep.mubr.f32.mxu0 0.0
        %1056 = vmatmul.mubr.f32.gmra.mrb[0].mxu0 %v926
        %v1057 = vpop.f32.mrb[0].mxu0
        %v1058 = vadd.f32 %v896, %v1057
        %v1059 = vpop.f32.mrb[0].mxu0
        %1060 = vmatprep.mubr.f32.mxu0 0.0
        %1061 = vmatmul.mubr.f32.gmra.mrb[0].mxu0 %v929
        %v1062 = vpop.f32.mrb[0].mxu0
        %v1063 = vadd.f32 %v896, %v1062
        %v1064 = vpop.f32.mrb[0].mxu0
        %1065 = vmatprep.mubr.f32.mxu0 0.0
        %1066 = vmatmul.mubr.f32.gmra.mrb[0].mxu0 %v932
        %v1067 = vpop.f32.mrb[0].mxu0
        %v1068 = vadd.f32 %v896, %v1067
        %v1069 = vpop.f32.mrb[0].mxu0
        %1070 = vmatprep.mubr.f32.mxu0 0.0
        %1071 = vmatmul.mubr.f32.gmra.mrb[0].mxu0 %v935
        %v1072 = vpop.f32.mrb[0].mxu0
        %v1073 = vadd.f32 %v896, %v1072
        %v1074 = vpop.f32.mrb[0].mxu0
        %1075 = vmatprep.mubr.f32.mxu0 0.0
        %1076 = vmatmul.mubr.f32.gmra.mrb[0].mxu0 %v938
        %v1077 = vpop.f32.mrb[0].mxu0
        %v1078 = vadd.f32 %v896, %v1077
        %v1079 = vpop.f32.mrb[0].mxu0
        %1080 = vmatprep.mubr.f32.mxu0 0.0
        %1081 = vmatmul.mubr.f32.gmra.mrb[0].mxu0 %v941
        %v1082 = vpop.f32.mrb[0].mxu0
        %v1083 = vadd.f32 %v896, %v1082
        %v1084 = vpop.f32.mrb[0].mxu0
        %1085 = vmatprep.mubr.f32.mxu0 0.0
        %1086 = vmatmul.mubr.f32.gmra.mrb[0].mxu0 %v944
        %v1087 = vpop.f32.mrb[0].mxu0
        %v1088 = vadd.f32 %v896, %v1087
        %v1089 = vpop.f32.mrb[0].mxu0
        %1090 = vdwg.mxu0
        %v1091 = vld [vmem:[%s7] sm:$0xff]
        %v1092 = vld [vmem:[%s7 + $0x8] sm:$0xff]
        %v1093 = vsub.f32 %v1013, %v1091
        %v1094 = vsub.f32 %v1018, %v1092
        %v1095 = vsub.f32 %v1023, %v1091
        %v1096 = vsub.f32 %v1028, %v1092
        %v1097 = vsub.f32 %v1033, %v1091
        %v1098 = vsub.f32 %v1038, %v1092
        %v1099 = vsub.f32 %v1043, %v1091
        %v1100 = vsub.f32 %v1048, %v1092
        %v1101 = vsub.f32 %v1053, %v1091
        %v1102 = vsub.f32 %v1058, %v1092
        %v1103 = vsub.f32 %v1063, %v1091
        %v1104 = vsub.f32 %v1068, %v1092
        %v1105 = vsub.f32 %v1073, %v1091
        %v1106 = vsub.f32 %v1078, %v1092
        %v1107 = vsub.f32 %v1083, %v1091
        %v1108 = vsub.f32 %v1088, %v1092
        %v1109 = vmul.f32 %v1093, %v1093
        %v1110 = vmul.f32 %v1094, %v1094
        %v1111 = vmul.f32 %v1095, %v1095
        %v1112 = vmul.f32 %v1096, %v1096
        %v1113 = vmul.f32 %v1097, %v1097
        %v1114 = vmul.f32 %v1098, %v1098
        %v1115 = vmul.f32 %v1099, %v1099
        %v1116 = vmul.f32 %v1100, %v1100
        %v1117 = vmul.f32 %v1101, %v1101
        %v1118 = vmul.f32 %v1102, %v1102
        %v1119 = vmul.f32 %v1103, %v1103
        %v1120 = vmul.f32 %v1104, %v1104
        %v1121 = vmul.f32 %v1105, %v1105
        %v1122 = vmul.f32 %v1106, %v1106
        %v1123 = vmul.f32 %v1107, %v1107
        %v1124 = vmul.f32 %v1108, %v1108
        %v1125 = vadd.f32 %v1109, %v1110
        %v1126 = vrot.slane %v1125, 4
        %v1127 = vadd.f32 %v1125, %v1126
        %v1128 = vrot.slane %v1127, 2
        %v1129 = vadd.f32 %v1127, %v1128
        %v1130 = vrot.slane %v1129, 1
        %v1131 = vadd.f32 %v1129, %v1130
        %v1132 = vadd.f32 %v1111, %v1112
        %v1133 = vrot.slane %v1132, 4
        %v1134 = vadd.f32 %v1132, %v1133
        %v1135 = vrot.slane %v1134, 2
        %v1136 = vadd.f32 %v1134, %v1135
        %v1137 = vrot.slane %v1136, 1
        %v1138 = vadd.f32 %v1136, %v1137
        %v1139 = vadd.f32 %v1113, %v1114
        %v1140 = vrot.slane %v1139, 4
        %v1141 = vadd.f32 %v1139, %v1140
        %v1142 = vrot.slane %v1141, 2
        %v1143 = vadd.f32 %v1141, %v1142
        %v1144 = vrot.slane %v1143, 1
        %v1145 = vadd.f32 %v1143, %v1144
        %v1146 = vadd.f32 %v1115, %v1116
        %v1147 = vrot.slane %v1146, 4
        %v1148 = vadd.f32 %v1146, %v1147
        %v1149 = vrot.slane %v1148, 2
        %v1150 = vadd.f32 %v1148, %v1149
        %v1151 = vrot.slane %v1150, 1
        %v1152 = vadd.f32 %v1150, %v1151
        %v1153 = vadd.f32 %v1117, %v1118
        %v1154 = vrot.slane %v1153, 4
        %v1155 = vadd.f32 %v1153, %v1154
        %v1156 = vrot.slane %v1155, 2
        %v1157 = vadd.f32 %v1155, %v1156
        %v1158 = vrot.slane %v1157, 1
        %v1159 = vadd.f32 %v1157, %v1158
        %v1160 = vadd.f32 %v1119, %v1120
        %v1161 = vrot.slane %v1160, 4
        %v1162 = vadd.f32 %v1160, %v1161
        %v1163 = vrot.slane %v1162, 2
        %v1164 = vadd.f32 %v1162, %v1163
        %v1165 = vrot.slane %v1164, 1
        %v1166 = vadd.f32 %v1164, %v1165
        %v1167 = vadd.f32 %v1121, %v1122
        %v1168 = vrot.slane %v1167, 4
        %v1169 = vadd.f32 %v1167, %v1168
        %v1170 = vrot.slane %v1169, 2
        %v1171 = vadd.f32 %v1169, %v1170
        %v1172 = vrot.slane %v1171, 1
        %v1173 = vadd.f32 %v1171, %v1172
        %v1174 = vadd.f32 %v1123, %v1124
        %v1175 = vrot.slane %v1174, 4
        %v1176 = vadd.f32 %v1174, %v1175
        %v1177 = vrot.slane %v1176, 2
        %v1178 = vadd.f32 %v1176, %v1177
        %v1179 = vrot.slane %v1178, 1
        %v1180 = vadd.f32 %v1178, %v1179
        %v1181 = vld [vmem:[%s6] sm:$0xff]
        %v1182 = vld [vmem:[%s6 + $0x8] sm:$0xff]
        %v1183 = vsub.f32 %v1013, %v1181
        %v1184 = vsub.f32 %v1018, %v1182
        %v1185 = vsub.f32 %v1023, %v1181
        %v1186 = vsub.f32 %v1028, %v1182
        %v1187 = vsub.f32 %v1033, %v1181
        %v1188 = vsub.f32 %v1038, %v1182
        %v1189 = vsub.f32 %v1043, %v1181
        %v1190 = vsub.f32 %v1048, %v1182
        %v1191 = vsub.f32 %v1053, %v1181
        %v1192 = vsub.f32 %v1058, %v1182
        %v1193 = vsub.f32 %v1063, %v1181
        %v1194 = vsub.f32 %v1068, %v1182
        %v1195 = vsub.f32 %v1073, %v1181
        %v1196 = vsub.f32 %v1078, %v1182
        %v1197 = vsub.f32 %v1083, %v1181
        %v1198 = vsub.f32 %v1088, %v1182
        %v1199 = vmul.f32 %v1183, %v1183
        %v1200 = vmul.f32 %v1184, %v1184
        %v1201 = vmul.f32 %v1185, %v1185
        %v1202 = vmul.f32 %v1186, %v1186
        %v1203 = vmul.f32 %v1187, %v1187
        %v1204 = vmul.f32 %v1188, %v1188
        %v1205 = vmul.f32 %v1189, %v1189
        %v1206 = vmul.f32 %v1190, %v1190
        %v1207 = vmul.f32 %v1191, %v1191
        %v1208 = vmul.f32 %v1192, %v1192
        %v1209 = vmul.f32 %v1193, %v1193
        %v1210 = vmul.f32 %v1194, %v1194
        %v1211 = vmul.f32 %v1195, %v1195
        %v1212 = vmul.f32 %v1196, %v1196
        %v1213 = vmul.f32 %v1197, %v1197
        %v1214 = vmul.f32 %v1198, %v1198
        %v1215 = vadd.f32 %v1199, %v1200
        %v1216 = vrot.slane %v1215, 4
        %v1217 = vadd.f32 %v1215, %v1216
        %v1218 = vrot.slane %v1217, 2
        %v1219 = vadd.f32 %v1217, %v1218
        %v1220 = vrot.slane %v1219, 1
        %v1221 = vadd.f32 %v1219, %v1220
        %v1222 = vadd.f32 %v1201, %v1202
        %v1223 = vrot.slane %v1222, 4
        %v1224 = vadd.f32 %v1222, %v1223
        %v1225 = vrot.slane %v1224, 2
        %v1226 = vadd.f32 %v1224, %v1225
        %v1227 = vrot.slane %v1226, 1
        %v1228 = vadd.f32 %v1226, %v1227
        %v1229 = vadd.f32 %v1203, %v1204
        %v1230 = vrot.slane %v1229, 4
        %v1231 = vadd.f32 %v1229, %v1230
        %v1232 = vrot.slane %v1231, 2
        %v1233 = vadd.f32 %v1231, %v1232
        %v1234 = vrot.slane %v1233, 1
        %v1235 = vadd.f32 %v1233, %v1234
        %v1236 = vadd.f32 %v1205, %v1206
        %v1237 = vrot.slane %v1236, 4
        %v1238 = vadd.f32 %v1236, %v1237
        %v1239 = vrot.slane %v1238, 2
        %v1240 = vadd.f32 %v1238, %v1239
        %v1241 = vrot.slane %v1240, 1
        %v1242 = vadd.f32 %v1240, %v1241
        %v1243 = vadd.f32 %v1207, %v1208
        %v1244 = vrot.slane %v1243, 4
        %v1245 = vadd.f32 %v1243, %v1244
        %v1246 = vrot.slane %v1245, 2
        %v1247 = vadd.f32 %v1245, %v1246
        %v1248 = vrot.slane %v1247, 1
        %v1249 = vadd.f32 %v1247, %v1248
        %v1250 = vadd.f32 %v1209, %v1210
        %v1251 = vrot.slane %v1250, 4
        %v1252 = vadd.f32 %v1250, %v1251
        %v1253 = vrot.slane %v1252, 2
        %v1254 = vadd.f32 %v1252, %v1253
        %v1255 = vrot.slane %v1254, 1
        %v1256 = vadd.f32 %v1254, %v1255
        %v1257 = vadd.f32 %v1211, %v1212
        %v1258 = vrot.slane %v1257, 4
        %v1259 = vadd.f32 %v1257, %v1258
        %v1260 = vrot.slane %v1259, 2
        %v1261 = vadd.f32 %v1259, %v1260
        %v1262 = vrot.slane %v1261, 1
        %v1263 = vadd.f32 %v1261, %v1262
        %v1264 = vadd.f32 %v1213, %v1214
        %v1265 = vrot.slane %v1264, 4
        %v1266 = vadd.f32 %v1264, %v1265
        %v1267 = vrot.slane %v1266, 2
        %v1268 = vadd.f32 %v1266, %v1267
        %v1269 = vrot.slane %v1268, 1
        %v1270 = vadd.f32 %v1268, %v1269
        %s1271 = sld [smem:[#allocation2]]
        %v1272 = vrsqrt.pop %v1131
        %v1273 = vmul.f32 %v1131, %v1272
        %vm1274 = vcmp.eq.f32.partialorder %v1131, inf
        %v1275 = vsel %vm1274, %v1131, %v1273
        %vm1276 = vcmp.eq.f32.partialorder %v1131, 0.0
        %v1277 = vand.u32 %v1131, 2147483648
        %v1278 = vsel %vm1276, %v1277, %v1275
        %v1279 = vrsqrt.pop %v1138
        %v1280 = vmul.f32 %v1138, %v1279
        %vm1281 = vcmp.eq.f32.partialorder %v1138, inf
        %v1282 = vsel %vm1281, %v1138, %v1280
        %vm1283 = vcmp.eq.f32.partialorder %v1138, 0.0
        %v1284 = vand.u32 %v1138, 2147483648
        %v1285 = vsel %vm1283, %v1284, %v1282
        %v1286 = vrsqrt.pop %v1145
        %v1287 = vmul.f32 %v1145, %v1286
        %vm1288 = vcmp.eq.f32.partialorder %v1145, inf
        %v1289 = vsel %vm1288, %v1145, %v1287
        %vm1290 = vcmp.eq.f32.partialorder %v1145, 0.0
        %v1291 = vand.u32 %v1145, 2147483648
        %v1292 = vsel %vm1290, %v1291, %v1289
        %v1293 = vrsqrt.pop %v1152
        %v1294 = vmul.f32 %v1152, %v1293
        %vm1295 = vcmp.eq.f32.partialorder %v1152, inf
        %v1296 = vsel %vm1295, %v1152, %v1294
        %vm1297 = vcmp.eq.f32.partialorder %v1152, 0.0
        %v1298 = vand.u32 %v1152, 2147483648
        %v1299 = vsel %vm1297, %v1298, %v1296
        %v1300 = vrsqrt.pop %v1159
        %v1301 = vmul.f32 %v1159, %v1300
        %vm1302 = vcmp.eq.f32.partialorder %v1159, inf
        %v1303 = vsel %vm1302, %v1159, %v1301
        %vm1304 = vcmp.eq.f32.partialorder %v1159, 0.0
        %v1305 = vand.u32 %v1159, 2147483648
        %v1306 = vsel %vm1304, %v1305, %v1303
        %v1307 = vrsqrt.pop %v1166
        %v1308 = vmul.f32 %v1166, %v1307
        %vm1309 = vcmp.eq.f32.partialorder %v1166, inf
        %v1310 = vsel %vm1309, %v1166, %v1308
        %vm1311 = vcmp.eq.f32.partialorder %v1166, 0.0
        %v1312 = vand.u32 %v1166, 2147483648
        %v1313 = vsel %vm1311, %v1312, %v1310
        %v1314 = vrsqrt.pop %v1173
        %v1315 = vmul.f32 %v1173, %v1314
        %vm1316 = vcmp.eq.f32.partialorder %v1173, inf
        %v1317 = vsel %vm1316, %v1173, %v1315
        %vm1318 = vcmp.eq.f32.partialorder %v1173, 0.0
        %v1319 = vand.u32 %v1173, 2147483648
        %v1320 = vsel %vm1318, %v1319, %v1317
        %v1321 = vrsqrt.pop %v1180
        %v1322 = vmul.f32 %v1180, %v1321
        %vm1323 = vcmp.eq.f32.partialorder %v1180, inf
        %v1324 = vsel %vm1323, %v1180, %v1322
        %vm1325 = vcmp.eq.f32.partialorder %v1180, 0.0
        %v1326 = vand.u32 %v1180, 2147483648
        %v1327 = vsel %vm1325, %v1326, %v1324
        %v1328 = vrsqrt.pop %v1221
        %v1329 = vmul.f32 %v1221, %v1328
        %vm1330 = vcmp.eq.f32.partialorder %v1221, inf
        %v1331 = vsel %vm1330, %v1221, %v1329
        %vm1332 = vcmp.eq.f32.partialorder %v1221, 0.0
        %v1333 = vand.u32 %v1221, 2147483648
        %v1334 = vsel %vm1332, %v1333, %v1331
        %v1335 = vrsqrt.pop %v1228
        %v1336 = vmul.f32 %v1228, %v1335
        %vm1337 = vcmp.eq.f32.partialorder %v1228, inf
        %v1338 = vsel %vm1337, %v1228, %v1336
        %vm1339 = vcmp.eq.f32.partialorder %v1228, 0.0
        %v1340 = vand.u32 %v1228, 2147483648
        %v1341 = vsel %vm1339, %v1340, %v1338
        %v1342 = vrsqrt.pop %v1235
        %v1343 = vmul.f32 %v1235, %v1342
        %vm1344 = vcmp.eq.f32.partialorder %v1235, inf
        %v1345 = vsel %vm1344, %v1235, %v1343
        %vm1346 = vcmp.eq.f32.partialorder %v1235, 0.0
        %v1347 = vand.u32 %v1235, 2147483648
        %v1348 = vsel %vm1346, %v1347, %v1345
        %v1349 = vrsqrt.pop %v1242
        %v1350 = vmul.f32 %v1242, %v1349
        %vm1351 = vcmp.eq.f32.partialorder %v1242, inf
        %v1352 = vsel %vm1351, %v1242, %v1350
        %vm1353 = vcmp.eq.f32.partialorder %v1242, 0.0
        %v1354 = vand.u32 %v1242, 2147483648
        %v1355 = vsel %vm1353, %v1354, %v1352
        %v1356 = vrsqrt.pop %v1249
        %v1357 = vmul.f32 %v1249, %v1356
        %vm1358 = vcmp.eq.f32.partialorder %v1249, inf
        %v1359 = vsel %vm1358, %v1249, %v1357
        %vm1360 = vcmp.eq.f32.partialorder %v1249, 0.0
        %v1361 = vand.u32 %v1249, 2147483648
        %v1362 = vsel %vm1360, %v1361, %v1359
        %v1363 = vrsqrt.pop %v1256
        %v1364 = vmul.f32 %v1256, %v1363
        %vm1365 = vcmp.eq.f32.partialorder %v1256, inf
        %v1366 = vsel %vm1365, %v1256, %v1364
        %vm1367 = vcmp.eq.f32.partialorder %v1256, 0.0
        %v1368 = vand.u32 %v1256, 2147483648
        %v1369 = vsel %vm1367, %v1368, %v1366
        %v1370 = vrsqrt.pop %v1263
        %v1371 = vmul.f32 %v1263, %v1370
        %vm1372 = vcmp.eq.f32.partialorder %v1263, inf
        %v1373 = vsel %vm1372, %v1263, %v1371
        %vm1374 = vcmp.eq.f32.partialorder %v1263, 0.0
        %v1375 = vand.u32 %v1263, 2147483648
        %v1376 = vsel %vm1374, %v1375, %v1373
        %v1377 = vrsqrt.pop %v1270
        %v1378 = vmul.f32 %v1270, %v1377
        %vm1379 = vcmp.eq.f32.partialorder %v1270, inf
        %v1380 = vsel %vm1379, %v1270, %v1378
        %vm1381 = vcmp.eq.f32.partialorder %v1270, 0.0
        %v1382 = vand.u32 %v1270, 2147483648
        %v1383 = vsel %vm1381, %v1382, %v1380
        %v1384 = vsub.f32 %v1278, %v1334
        %v1385 = vsub.f32 %v1285, %v1341
        %v1386 = vsub.f32 %v1292, %v1348
        %v1387 = vsub.f32 %v1299, %v1355
        %v1388 = vsub.f32 %v1306, %v1362
        %v1389 = vsub.f32 %v1313, %v1369
        %v1390 = vsub.f32 %v1320, %v1376
        %v1391 = vsub.f32 %v1327, %v1383
        %v1392 = vstv %s1271
        %v1393 = vmul.f32 %v1392, %v1384
        %v1394 = vmul.f32 %v1392, %v1385
        %v1395 = vmul.f32 %v1392, %v1386
        %v1396 = vmul.f32 %v1392, %v1387
        %v1397 = vmul.f32 %v1392, %v1388
        %v1398 = vmul.f32 %v1392, %v1389
        %v1399 = vmul.f32 %v1392, %v1390
        %v1400 = vmul.f32 %v1392, %v1391
        %v1401 = vxor.u32 %v1393, 2147483648
        %v1402 = vxor.u32 %v1394, 2147483648
        %v1403 = vxor.u32 %v1395, 2147483648
        %v1404 = vxor.u32 %v1396, 2147483648
        %v1405 = vxor.u32 %v1397, 2147483648
        %v1406 = vxor.u32 %v1398, 2147483648
        %v1407 = vxor.u32 %v1399, 2147483648
        %v1408 = vxor.u32 %v1400, 2147483648
        %v1409 = vmul.f32 %v1401, 1.442695
        %v1410 = vpow.pop %v1409
        %v1411 = vmul.f32 %v1402, 1.442695
        %v1412 = vpow.pop %v1411
        %v1413 = vmul.f32 %v1403, 1.442695
        %v1414 = vpow.pop %v1413
        %v1415 = vmul.f32 %v1404, 1.442695
        %v1416 = vpow.pop %v1415
        %v1417 = vmul.f32 %v1405, 1.442695
        %v1418 = vpow.pop %v1417
        %v1419 = vmul.f32 %v1406, 1.442695
        %v1420 = vpow.pop %v1419
        %v1421 = vmul.f32 %v1407, 1.442695
        %v1422 = vpow.pop %v1421
        %v1423 = vmul.f32 %v1408, 1.442695
        %v1424 = vpow.pop %v1423
        %v1425 = vadd.f32 %v1410, 1.0
        %v1426 = vadd.f32 %v1412, 1.0
        %v1427 = vadd.f32 %v1414, 1.0
        %v1428 = vadd.f32 %v1416, 1.0
        %v1429 = vadd.f32 %v1418, 1.0
        %v1430 = vadd.f32 %v1420, 1.0
        %v1431 = vadd.f32 %v1422, 1.0
        %v1432 = vadd.f32 %v1424, 1.0
        %v1433 = vrcp.pop %v1425
        %v1434 = vmul.f32 1.0, %v1433
        %v1435 = vrcp.pop %v1426
        %v1436 = vmul.f32 1.0, %v1435
        %v1437 = vrcp.pop %v1427
        %v1438 = vmul.f32 1.0, %v1437
        %v1439 = vrcp.pop %v1428
        %v1440 = vmul.f32 1.0, %v1439
        %v1441 = vrcp.pop %v1429
        %v1442 = vmul.f32 1.0, %v1441
        %v1443 = vrcp.pop %v1430
        %v1444 = vmul.f32 1.0, %v1443
        %v1445 = vrcp.pop %v1431
        %v1446 = vmul.f32 1.0, %v1445
        %v1447 = vrcp.pop %v1432
        %v1448 = vmul.f32 1.0, %v1447
        %vm1457 = vcmask 1041409
        %v1458 = vsel %vm1457, %v1436, %v1434
        %vm1459 = vcmask 1042434
        %v1460 = vsel %vm1459, %v1438, %v1458
        %vm1461 = vcmask 1043459
        %v1462 = vsel %vm1461, %v1440, %v1460
        %vm1463 = vcmask 1044484
        %v1464 = vsel %vm1463, %v1442, %v1462
        %vm1465 = vcmask 1045509
        %v1466 = vsel %vm1465, %v1444, %v1464
        %vm1467 = vcmask 1046534
        %v1468 = vsel %vm1467, %v1446, %v1466
        %vm1469 = vcmask 1047559
        %v1470 = vsel %vm1469, %v1448, %v1468
        %1472 = vst [vmem:[%s400] sm:$0xff] %v1470
        %v1473 = vld [vmem:[#allocation3] sm:$0xff]
        %v1474 = vld [vmem:[#allocation3 + $0x8] sm:$0xff]
        %v1475 = vld [vmem:[#allocation3 + $0x10] sm:$0xff]
        %v1476 = vld [vmem:[#allocation3 + $0x18] sm:$0xff]
        %v1477 = vld [vmem:[#allocation3 + $0x20] sm:$0xff]
        %v1478 = vld [vmem:[#allocation3 + $0x28] sm:$0xff]
        %v1479 = vld [vmem:[#allocation3 + $0x30] sm:$0xff]
        %v1480 = vld [vmem:[#allocation3 + $0x38] sm:$0xff]
        %v1481 = vld [vmem:[#allocation3 + $0x40] sm:$0xff]
        %v1482 = vld [vmem:[#allocation3 + $0x48] sm:$0xff]
        %v1483 = vld [vmem:[#allocation3 + $0x50] sm:$0xff]
        %v1484 = vld [vmem:[#allocation3 + $0x58] sm:$0xff]
        %v1485 = vld [vmem:[#allocation3 + $0x60] sm:$0xff]
        %v1486 = vld [vmem:[#allocation3 + $0x68] sm:$0xff]
        %v1487 = vld [vmem:[#allocation3 + $0x70] sm:$0xff]
        %v1488 = vld [vmem:[#allocation3 + $0x78] sm:$0xff]
        %v1489 = vld [vmem:[#allocation3 + $0x80] sm:$0xff]
        %v1490 = vld [vmem:[#allocation3 + $0x88] sm:$0xff]
        %v1491 = vld [vmem:[#allocation3 + $0x90] sm:$0xff]
        %v1492 = vld [vmem:[#allocation3 + $0x98] sm:$0xff]
        %v1493 = vld [vmem:[#allocation3 + $0xa0] sm:$0xff]
        %v1494 = vld [vmem:[#allocation3 + $0xa8] sm:$0xff]
        %v1495 = vld [vmem:[#allocation3 + $0xb0] sm:$0xff]
        %v1496 = vld [vmem:[#allocation3 + $0xb8] sm:$0xff]
        %v1497 = vld [vmem:[#allocation3 + $0xc0] sm:$0xff]
        %v1498 = vld [vmem:[#allocation3 + $0xc8] sm:$0xff]
        %v1499 = vld [vmem:[#allocation3 + $0xd0] sm:$0xff]
        %v1500 = vld [vmem:[#allocation3 + $0xd8] sm:$0xff]
        %v1501 = vld [vmem:[#allocation3 + $0xe0] sm:$0xff]
        %v1502 = vld [vmem:[#allocation3 + $0xe8] sm:$0xff]
        %v1503 = vld [vmem:[#allocation3 + $0xf0] sm:$0xff]
        %v1504 = vld [vmem:[#allocation3 + $0xf8] sm:$0xff]
        %v1505 = vld [vmem:[#allocation3 + $0x100] sm:$0xff]
        %v1506 = vld [vmem:[#allocation3 + $0x108] sm:$0xff]
        %v1507 = vld [vmem:[#allocation3 + $0x110] sm:$0xff]
        %v1508 = vld [vmem:[#allocation3 + $0x118] sm:$0xff]
        %v1509 = vld [vmem:[#allocation3 + $0x120] sm:$0xff]
        %v1510 = vld [vmem:[#allocation3 + $0x128] sm:$0xff]
        %v1511 = vld [vmem:[#allocation3 + $0x130] sm:$0xff]
        %v1512 = vld [vmem:[#allocation3 + $0x138] sm:$0xff]
        %v1513 = vld [vmem:[#allocation3 + $0x140] sm:$0xff]
        %v1514 = vld [vmem:[#allocation3 + $0x148] sm:$0xff]
        %v1515 = vld [vmem:[#allocation3 + $0x150] sm:$0xff]
        %v1516 = vld [vmem:[#allocation3 + $0x158] sm:$0xff]
        %v1517 = vld [vmem:[#allocation3 + $0x160] sm:$0xff]
        %v1518 = vld [vmem:[#allocation3 + $0x168] sm:$0xff]
        %v1519 = vld [vmem:[#allocation3 + $0x170] sm:$0xff]
        %v1520 = vld [vmem:[#allocation3 + $0x178] sm:$0xff]
        %v1521 = vld [vmem:[#allocation3 + $0x180] sm:$0xff]
        %v1522 = vld [vmem:[#allocation3 + $0x188] sm:$0xff]
        %v1523 = vld [vmem:[#allocation3 + $0x190] sm:$0xff]
        %v1524 = vld [vmem:[#allocation3 + $0x198] sm:$0xff]
        %v1525 = vld [vmem:[#allocation3 + $0x1a0] sm:$0xff]
        %v1526 = vld [vmem:[#allocation3 + $0x1a8] sm:$0xff]
        %v1527 = vld [vmem:[#allocation3 + $0x1b0] sm:$0xff]
        %v1528 = vld [vmem:[#allocation3 + $0x1b8] sm:$0xff]
        %v1529 = vld [vmem:[#allocation3 + $0x1c0] sm:$0xff]
        %v1530 = vld [vmem:[#allocation3 + $0x1c8] sm:$0xff]
        %v1531 = vld [vmem:[#allocation3 + $0x1d0] sm:$0xff]
        %v1532 = vld [vmem:[#allocation3 + $0x1d8] sm:$0xff]
        %v1533 = vld [vmem:[#allocation3 + $0x1e0] sm:$0xff]
        %v1534 = vld [vmem:[#allocation3 + $0x1e8] sm:$0xff]
        %v1535 = vld [vmem:[#allocation3 + $0x1f0] sm:$0xff]
        %v1536 = vld [vmem:[#allocation3 + $0x1f8] sm:$0xff]
        %v1537 = vld [vmem:[#allocation3 + $0x200] sm:$0xff]
        %v1538 = vld [vmem:[#allocation3 + $0x208] sm:$0xff]
        %v1539 = vld [vmem:[#allocation3 + $0x210] sm:$0xff]
        %v1540 = vld [vmem:[#allocation3 + $0x218] sm:$0xff]
        %v1541 = vld [vmem:[#allocation3 + $0x220] sm:$0xff]
        %v1542 = vld [vmem:[#allocation3 + $0x228] sm:$0xff]
        %v1543 = vld [vmem:[#allocation3 + $0x230] sm:$0xff]
        %v1544 = vld [vmem:[#allocation3 + $0x238] sm:$0xff]
        %v1545 = vld [vmem:[#allocation3 + $0x240] sm:$0xff]
        %v1546 = vld [vmem:[#allocation3 + $0x248] sm:$0xff]
        %v1547 = vld [vmem:[#allocation3 + $0x250] sm:$0xff]
        %v1548 = vld [vmem:[#allocation3 + $0x258] sm:$0xff]
        %v1549 = vld [vmem:[#allocation3 + $0x260] sm:$0xff]
        %v1550 = vld [vmem:[#allocation3 + $0x268] sm:$0xff]
        %v1551 = vld [vmem:[#allocation3 + $0x270] sm:$0xff]
        %v1552 = vld [vmem:[#allocation3 + $0x278] sm:$0xff]
        %v1553 = vld [vmem:[#allocation3 + $0x280] sm:$0xff]
        %v1554 = vld [vmem:[#allocation3 + $0x288] sm:$0xff]
        %v1555 = vld [vmem:[#allocation3 + $0x290] sm:$0xff]
        %v1556 = vld [vmem:[#allocation3 + $0x298] sm:$0xff]
        %v1557 = vld [vmem:[#allocation3 + $0x2a0] sm:$0xff]
        %v1558 = vld [vmem:[#allocation3 + $0x2a8] sm:$0xff]
        %v1559 = vld [vmem:[#allocation3 + $0x2b0] sm:$0xff]
        %v1560 = vld [vmem:[#allocation3 + $0x2b8] sm:$0xff]
        %v1561 = vld [vmem:[#allocation3 + $0x2c0] sm:$0xff]
        %v1562 = vld [vmem:[#allocation3 + $0x2c8] sm:$0xff]
        %v1563 = vld [vmem:[#allocation3 + $0x2d0] sm:$0xff]
        %v1564 = vld [vmem:[#allocation3 + $0x2d8] sm:$0xff]
        %v1565 = vld [vmem:[#allocation3 + $0x2e0] sm:$0xff]
        %v1566 = vld [vmem:[#allocation3 + $0x2e8] sm:$0xff]
        %v1567 = vld [vmem:[#allocation3 + $0x2f0] sm:$0xff]
        %v1568 = vld [vmem:[#allocation3 + $0x2f8] sm:$0xff]
        %v1569 = vld [vmem:[#allocation3 + $0x300] sm:$0xff]
        %v1570 = vld [vmem:[#allocation3 + $0x308] sm:$0xff]
        %v1571 = vld [vmem:[#allocation3 + $0x310] sm:$0xff]
        %v1572 = vld [vmem:[#allocation3 + $0x318] sm:$0xff]
        %v1573 = vld [vmem:[#allocation3 + $0x320] sm:$0xff]
        %v1574 = vld [vmem:[#allocation3 + $0x328] sm:$0xff]
        %v1575 = vld [vmem:[#allocation3 + $0x330] sm:$0xff]
        %v1576 = vld [vmem:[#allocation3 + $0x338] sm:$0xff]
        %v1577 = vld [vmem:[#allocation3 + $0x340] sm:$0xff]
        %v1578 = vld [vmem:[#allocation3 + $0x348] sm:$0xff]
        %v1579 = vld [vmem:[#allocation3 + $0x350] sm:$0xff]
        %v1580 = vld [vmem:[#allocation3 + $0x358] sm:$0xff]
        %v1581 = vld [vmem:[#allocation3 + $0x360] sm:$0xff]
        %v1582 = vld [vmem:[#allocation3 + $0x368] sm:$0xff]
        %v1583 = vld [vmem:[#allocation3 + $0x370] sm:$0xff]
        %v1584 = vld [vmem:[#allocation3 + $0x378] sm:$0xff]
        %v1585 = vld [vmem:[#allocation3 + $0x380] sm:$0xff]
        %v1586 = vld [vmem:[#allocation3 + $0x388] sm:$0xff]
        %v1587 = vld [vmem:[#allocation3 + $0x390] sm:$0xff]
        %v1588 = vld [vmem:[#allocation3 + $0x398] sm:$0xff]
        %v1589 = vld [vmem:[#allocation3 + $0x3a0] sm:$0xff]
        %v1590 = vld [vmem:[#allocation3 + $0x3a8] sm:$0xff]
        %v1591 = vld [vmem:[#allocation3 + $0x3b0] sm:$0xff]
        %v1592 = vld [vmem:[#allocation3 + $0x3b8] sm:$0xff]
        %v1593 = vld [vmem:[#allocation3 + $0x3c0] sm:$0xff]
        %v1594 = vld [vmem:[#allocation3 + $0x3c8] sm:$0xff]
        %v1595 = vld [vmem:[#allocation3 + $0x3d0] sm:$0xff]
        %v1596 = vld [vmem:[#allocation3 + $0x3d8] sm:$0xff]
        %v1597 = vld [vmem:[#allocation3 + $0x3e0] sm:$0xff]
        %v1598 = vld [vmem:[#allocation3 + $0x3e8] sm:$0xff]
        %v1599 = vld [vmem:[#allocation3 + $0x3f0] sm:$0xff]
        %v1600 = vld [vmem:[#allocation3 + $0x3f8] sm:$0xff]
        %v1601 = vld [vmem:[#allocation3 + $0x400] sm:$0xff]
        %v1602 = vld [vmem:[#allocation3 + $0x408] sm:$0xff]
        %v1603 = vld [vmem:[#allocation3 + $0x410] sm:$0xff]
        %v1604 = vld [vmem:[#allocation3 + $0x418] sm:$0xff]
        %v1605 = vld [vmem:[#allocation3 + $0x420] sm:$0xff]
        %v1606 = vld [vmem:[#allocation3 + $0x428] sm:$0xff]
        %v1607 = vld [vmem:[#allocation3 + $0x430] sm:$0xff]
        %v1608 = vld [vmem:[#allocation3 + $0x438] sm:$0xff]
        %v1609 = vld [vmem:[#allocation3 + $0x440] sm:$0xff]
        %v1610 = vld [vmem:[#allocation3 + $0x448] sm:$0xff]
        %v1611 = vld [vmem:[#allocation3 + $0x450] sm:$0xff]
        %v1612 = vld [vmem:[#allocation3 + $0x458] sm:$0xff]
        %v1613 = vld [vmem:[#allocation3 + $0x460] sm:$0xff]
        %v1614 = vld [vmem:[#allocation3 + $0x468] sm:$0xff]
        %v1615 = vld [vmem:[#allocation3 + $0x470] sm:$0xff]
        %v1616 = vld [vmem:[#allocation3 + $0x478] sm:$0xff]
        %v1617 = vld [vmem:[#allocation3 + $0x480] sm:$0xff]
        %v1618 = vld [vmem:[#allocation3 + $0x488] sm:$0xff]
        %v1619 = vld [vmem:[#allocation3 + $0x490] sm:$0xff]
        %v1620 = vld [vmem:[#allocation3 + $0x498] sm:$0xff]
        %v1621 = vld [vmem:[#allocation3 + $0x4a0] sm:$0xff]
        %v1622 = vld [vmem:[#allocation3 + $0x4a8] sm:$0xff]
        %v1623 = vld [vmem:[#allocation3 + $0x4b0] sm:$0xff]
        %v1624 = vld [vmem:[#allocation3 + $0x4b8] sm:$0xff]
        %v1625 = vld [vmem:[#allocation3 + $0x4c0] sm:$0xff]
        %v1626 = vld [vmem:[#allocation3 + $0x4c8] sm:$0xff]
        %v1627 = vld [vmem:[#allocation3 + $0x4d0] sm:$0xff]
        %v1628 = vld [vmem:[#allocation3 + $0x4d8] sm:$0xff]
        %v1629 = vld [vmem:[#allocation3 + $0x4e0] sm:$0xff]
        %v1630 = vld [vmem:[#allocation3 + $0x4e8] sm:$0xff]
        %v1631 = vld [vmem:[#allocation3 + $0x4f0] sm:$0xff]
        %v1632 = vld [vmem:[#allocation3 + $0x4f8] sm:$0xff]
        %v1633 = vld [vmem:[#allocation3 + $0x500] sm:$0xff]
        %v1634 = vld [vmem:[#allocation3 + $0x508] sm:$0xff]
        %v1635 = vld [vmem:[#allocation3 + $0x510] sm:$0xff]
        %v1636 = vld [vmem:[#allocation3 + $0x518] sm:$0xff]
        %v1637 = vld [vmem:[#allocation3 + $0x520] sm:$0xff]
        %v1638 = vld [vmem:[#allocation3 + $0x528] sm:$0xff]
        %v1639 = vld [vmem:[#allocation3 + $0x530] sm:$0xff]
        %v1640 = vld [vmem:[#allocation3 + $0x538] sm:$0xff]
        %v1641 = vld [vmem:[#allocation3 + $0x540] sm:$0xff]
        %v1642 = vld [vmem:[#allocation3 + $0x548] sm:$0xff]
        %v1643 = vld [vmem:[#allocation3 + $0x550] sm:$0xff]
        %v1644 = vld [vmem:[#allocation3 + $0x558] sm:$0xff]
        %v1645 = vld [vmem:[#allocation3 + $0x560] sm:$0xff]
        %v1646 = vld [vmem:[#allocation3 + $0x568] sm:$0xff]
        %v1647 = vld [vmem:[#allocation3 + $0x570] sm:$0xff]
        %v1648 = vld [vmem:[#allocation3 + $0x578] sm:$0xff]
        %v1649 = vld [vmem:[#allocation3 + $0x580] sm:$0xff]
        %v1650 = vld [vmem:[#allocation3 + $0x588] sm:$0xff]
        %v1651 = vld [vmem:[#allocation3 + $0x590] sm:$0xff]
        %v1652 = vld [vmem:[#allocation3 + $0x598] sm:$0xff]
        %v1653 = vld [vmem:[#allocation3 + $0x5a0] sm:$0xff]
        %v1654 = vld [vmem:[#allocation3 + $0x5a8] sm:$0xff]
        %v1655 = vld [vmem:[#allocation3 + $0x5b0] sm:$0xff]
        %v1656 = vld [vmem:[#allocation3 + $0x5b8] sm:$0xff]
        %v1657 = vld [vmem:[#allocation3 + $0x5c0] sm:$0xff]
        %v1658 = vld [vmem:[#allocation3 + $0x5c8] sm:$0xff]
        %v1659 = vld [vmem:[#allocation3 + $0x5d0] sm:$0xff]
        %v1660 = vld [vmem:[#allocation3 + $0x5d8] sm:$0xff]
        %v1661 = vld [vmem:[#allocation3 + $0x5e0] sm:$0xff]
        %v1662 = vld [vmem:[#allocation3 + $0x5e8] sm:$0xff]
        %v1663 = vld [vmem:[#allocation3 + $0x5f0] sm:$0xff]
        %v1664 = vld [vmem:[#allocation3 + $0x5f8] sm:$0xff]
        %v1665 = vld [vmem:[#allocation3 + $0x600] sm:$0xff]
        %v1666 = vld [vmem:[#allocation3 + $0x608] sm:$0xff]
        %v1667 = vld [vmem:[#allocation3 + $0x610] sm:$0xff]
        %v1668 = vld [vmem:[#allocation3 + $0x618] sm:$0xff]
        %v1669 = vld [vmem:[#allocation3 + $0x620] sm:$0xff]
        %v1670 = vld [vmem:[#allocation3 + $0x628] sm:$0xff]
        %v1671 = vld [vmem:[#allocation3 + $0x630] sm:$0xff]
        %v1672 = vld [vmem:[#allocation3 + $0x638] sm:$0xff]
        %v1673 = vld [vmem:[#allocation3 + $0x640] sm:$0xff]
        %v1674 = vld [vmem:[#allocation3 + $0x648] sm:$0xff]
        %v1675 = vld [vmem:[#allocation3 + $0x650] sm:$0xff]
        %v1676 = vld [vmem:[#allocation3 + $0x658] sm:$0xff]
        %v1677 = vld [vmem:[#allocation3 + $0x660] sm:$0xff]
        %v1678 = vld [vmem:[#allocation3 + $0x668] sm:$0xff]
        %v1679 = vld [vmem:[#allocation3 + $0x670] sm:$0xff]
        %v1680 = vld [vmem:[#allocation3 + $0x678] sm:$0xff]
        %v1681 = vld [vmem:[#allocation3 + $0x680] sm:$0xff]
        %v1682 = vld [vmem:[#allocation3 + $0x688] sm:$0xff]
        %v1683 = vld [vmem:[#allocation3 + $0x690] sm:$0xff]
        %v1684 = vld [vmem:[#allocation3 + $0x698] sm:$0xff]
        %v1685 = vld [vmem:[#allocation3 + $0x6a0] sm:$0xff]
        %v1686 = vld [vmem:[#allocation3 + $0x6a8] sm:$0xff]
        %v1687 = vld [vmem:[#allocation3 + $0x6b0] sm:$0xff]
        %v1688 = vld [vmem:[#allocation3 + $0x6b8] sm:$0xff]
        %v1689 = vld [vmem:[#allocation3 + $0x6c0] sm:$0xff]
        %v1690 = vld [vmem:[#allocation3 + $0x6c8] sm:$0xff]
        %v1691 = vld [vmem:[#allocation3 + $0x6d0] sm:$0xff]
        %v1692 = vld [vmem:[#allocation3 + $0x6d8] sm:$0xff]
        %v1693 = vld [vmem:[#allocation3 + $0x6e0] sm:$0xff]
        %v1694 = vld [vmem:[#allocation3 + $0x6e8] sm:$0xff]
        %v1695 = vld [vmem:[#allocation3 + $0x6f0] sm:$0xff]
        %v1696 = vld [vmem:[#allocation3 + $0x6f8] sm:$0xff]
        %v1697 = vld [vmem:[#allocation3 + $0x700] sm:$0xff]
        %v1698 = vld [vmem:[#allocation3 + $0x708] sm:$0xff]
        %v1699 = vld [vmem:[#allocation3 + $0x710] sm:$0xff]
        %v1700 = vld [vmem:[#allocation3 + $0x718] sm:$0xff]
        %v1701 = vld [vmem:[#allocation3 + $0x720] sm:$0xff]
        %v1702 = vld [vmem:[#allocation3 + $0x728] sm:$0xff]
        %v1703 = vld [vmem:[#allocation3 + $0x730] sm:$0xff]
        %v1704 = vld [vmem:[#allocation3 + $0x738] sm:$0xff]
        %v1705 = vld [vmem:[#allocation3 + $0x740] sm:$0xff]
        %v1706 = vld [vmem:[#allocation3 + $0x748] sm:$0xff]
        %v1707 = vld [vmem:[#allocation3 + $0x750] sm:$0xff]
        %v1708 = vld [vmem:[#allocation3 + $0x758] sm:$0xff]
        %v1709 = vld [vmem:[#allocation3 + $0x760] sm:$0xff]
        %v1710 = vld [vmem:[#allocation3 + $0x768] sm:$0xff]
        %v1711 = vld [vmem:[#allocation3 + $0x770] sm:$0xff]
        %v1712 = vld [vmem:[#allocation3 + $0x778] sm:$0xff]
        %v1713 = vld [vmem:[#allocation3 + $0x780] sm:$0xff]
        %v1714 = vld [vmem:[#allocation3 + $0x788] sm:$0xff]
        %v1715 = vld [vmem:[#allocation3 + $0x790] sm:$0xff]
        %v1716 = vld [vmem:[#allocation3 + $0x798] sm:$0xff]
        %v1717 = vld [vmem:[#allocation3 + $0x7a0] sm:$0xff]
        %v1718 = vld [vmem:[#allocation3 + $0x7a8] sm:$0xff]
        %v1719 = vld [vmem:[#allocation3 + $0x7b0] sm:$0xff]
        %v1720 = vld [vmem:[#allocation3 + $0x7b8] sm:$0xff]
        %v1721 = vld [vmem:[#allocation3 + $0x7c0] sm:$0xff]
        %v1722 = vld [vmem:[#allocation3 + $0x7c8] sm:$0xff]
        %v1723 = vld [vmem:[#allocation3 + $0x7d0] sm:$0xff]
        %v1724 = vld [vmem:[#allocation3 + $0x7d8] sm:$0xff]
        %v1725 = vld [vmem:[#allocation3 + $0x7e0] sm:$0xff]
        %v1726 = vld [vmem:[#allocation3 + $0x7e8] sm:$0xff]
        %v1727 = vld [vmem:[#allocation3 + $0x7f0] sm:$0xff]
        %v1728 = vld [vmem:[#allocation3 + $0x7f8] sm:$0xff]
        %v1729 = vld [vmem:[%s9] sm:$0x1]
        %v1731 = vlaneseq
        %v1732 = vshrl.u32 %v1731, 7
        %v1733 = vsub.s32 0, %v1732
        %v1734 = vrot.slane %v1729, %v1733
        %v1752 = vcombine.low %v1013, %v1023
        %v1753 = vcombine.high %v1013, %v1023
        %v1754 = vcombine.low %v1033, %v1043
        %v1755 = vcombine.high %v1033, %v1043
        %v1756 = vcombine.low %v1053, %v1063
        %v1757 = vcombine.high %v1053, %v1063
        %v1758 = vcombine.low %v1073, %v1083
        %v1759 = vcombine.high %v1073, %v1083
        %v1761 = vunpack.c.l.s4 1966171168
        %v1762 = vunpack.c.0.s8 %v1761
        %v1763 = vlaneseq
        %v1764 = vshrl.u32 %v1763, 7
        %v1765 = vsub.s32 %v1762, %v1764
        %v1766 = vrot.slane %v1752, %v1765
        %v1768 = vunpack.c.l.s4 1966171168
        %v1769 = vunpack.c.0.s8 %v1768
        %v1770 = vlaneseq
        %v1771 = vshrl.u32 %v1770, 7
        %v1772 = vsub.s32 %v1769, %v1771
        %v1773 = vrot.slane %v1753, %v1772
        %v1775 = vunpack.c.l.s4 1966171168
        %v1776 = vunpack.c.0.s8 %v1775
        %v1777 = vlaneseq
        %v1778 = vshrl.u32 %v1777, 7
        %v1779 = vsub.s32 %v1776, %v1778
        %v1780 = vrot.slane %v1754, %v1779
        %v1782 = vunpack.c.l.s4 1966171168
        %v1783 = vunpack.c.0.s8 %v1782
        %v1784 = vlaneseq
        %v1785 = vshrl.u32 %v1784, 7
        %v1786 = vsub.s32 %v1783, %v1785
        %v1787 = vrot.slane %v1755, %v1786
        %v1789 = vunpack.c.l.s4 1966171168
        %v1790 = vunpack.c.0.s8 %v1789
        %v1791 = vlaneseq
        %v1792 = vshrl.u32 %v1791, 7
        %v1793 = vsub.s32 %v1790, %v1792
        %v1794 = vrot.slane %v1756, %v1793
        %v1796 = vunpack.c.l.s4 1966171168
        %v1797 = vunpack.c.0.s8 %v1796
        %v1798 = vlaneseq
        %v1799 = vshrl.u32 %v1798, 7
        %v1800 = vsub.s32 %v1797, %v1799
        %v1801 = vrot.slane %v1757, %v1800
        %v1803 = vunpack.c.l.s4 1966171168
        %v1804 = vunpack.c.0.s8 %v1803
        %v1805 = vlaneseq
        %v1806 = vshrl.u32 %v1805, 7
        %v1807 = vsub.s32 %v1804, %v1806
        %v1808 = vrot.slane %v1758, %v1807
        %v1810 = vunpack.c.l.s4 1966171168
        %v1811 = vunpack.c.0.s8 %v1810
        %v1812 = vlaneseq
        %v1813 = vshrl.u32 %v1812, 7
        %v1814 = vsub.s32 %v1811, %v1813
        %v1815 = vrot.slane %v1759, %v1814
        %v1816 = vcombine.low %v1766, %v1780
        %v1817 = vcombine.high %v1766, %v1780
        %v1818 = vcombine.low %v1773, %v1787
        %v1819 = vcombine.high %v1773, %v1787
        %v1820 = vcombine.low %v1794, %v1808
        %v1821 = vcombine.high %v1794, %v1808
        %v1822 = vcombine.low %v1801, %v1815
        %v1823 = vcombine.high %v1801, %v1815
        %v1825 = vunpack.c.l.s4 1966171168
        %v1826 = vunpack.c.0.s8 %v1825
        %v1827 = vlaneseq
        %v1828 = vshrl.u32 %v1827, 7
        %v1829 = vsub.s32 %v1826, %v1828
        %v1830 = vrot.slane %v1816, %v1829
        %v1832 = vunpack.c.l.s4 1966171168
        %v1833 = vunpack.c.0.s8 %v1832
        %v1834 = vlaneseq
        %v1835 = vshrl.u32 %v1834, 7
        %v1836 = vsub.s32 %v1833, %v1835
        %v1837 = vrot.slane %v1818, %v1836
        %v1839 = vunpack.c.l.s4 1966171168
        %v1840 = vunpack.c.0.s8 %v1839
        %v1841 = vlaneseq
        %v1842 = vshrl.u32 %v1841, 7
        %v1843 = vsub.s32 %v1840, %v1842
        %v1844 = vrot.slane %v1817, %v1843
        %v1846 = vunpack.c.l.s4 1966171168
        %v1847 = vunpack.c.0.s8 %v1846
        %v1848 = vlaneseq
        %v1849 = vshrl.u32 %v1848, 7
        %v1850 = vsub.s32 %v1847, %v1849
        %v1851 = vrot.slane %v1819, %v1850
        %v1853 = vunpack.c.l.s4 1966171168
        %v1854 = vunpack.c.0.s8 %v1853
        %v1855 = vlaneseq
        %v1856 = vshrl.u32 %v1855, 7
        %v1857 = vsub.s32 %v1854, %v1856
        %v1858 = vrot.slane %v1820, %v1857
        %v1860 = vunpack.c.l.s4 1966171168
        %v1861 = vunpack.c.0.s8 %v1860
        %v1862 = vlaneseq
        %v1863 = vshrl.u32 %v1862, 7
        %v1864 = vsub.s32 %v1861, %v1863
        %v1865 = vrot.slane %v1822, %v1864
        %v1867 = vunpack.c.l.s4 1966171168
        %v1868 = vunpack.c.0.s8 %v1867
        %v1869 = vlaneseq
        %v1870 = vshrl.u32 %v1869, 7
        %v1871 = vsub.s32 %v1868, %v1870
        %v1872 = vrot.slane %v1821, %v1871
        %v1874 = vunpack.c.l.s4 1966171168
        %v1875 = vunpack.c.0.s8 %v1874
        %v1876 = vlaneseq
        %v1877 = vshrl.u32 %v1876, 7
        %v1878 = vsub.s32 %v1875, %v1877
        %v1879 = vrot.slane %v1823, %v1878
        %v1880 = vcombine.low %v1830, %v1858
        %v1881 = vcombine.high %v1830, %v1858
        %v1882 = vcombine.low %v1837, %v1865
        %v1883 = vcombine.high %v1837, %v1865
        %v1884 = vcombine.low %v1844, %v1872
        %v1885 = vcombine.high %v1844, %v1872
        %v1886 = vcombine.low %v1851, %v1879
        %v1887 = vcombine.high %v1851, %v1879
        %v1888 = vcombine.low %v1018, %v1028
        %v1889 = vcombine.high %v1018, %v1028
        %v1890 = vcombine.low %v1038, %v1048
        %v1891 = vcombine.high %v1038, %v1048
        %v1892 = vcombine.low %v1058, %v1068
        %v1893 = vcombine.high %v1058, %v1068
        %v1894 = vcombine.low %v1078, %v1088
        %v1895 = vcombine.high %v1078, %v1088
        %v1897 = vunpack.c.l.s4 1966171168
        %v1898 = vunpack.c.0.s8 %v1897
        %v1899 = vlaneseq
        %v1900 = vshrl.u32 %v1899, 7
        %v1901 = vsub.s32 %v1898, %v1900
        %v1902 = vrot.slane %v1888, %v1901
        %v1904 = vunpack.c.l.s4 1966171168
        %v1905 = vunpack.c.0.s8 %v1904
        %v1906 = vlaneseq
        %v1907 = vshrl.u32 %v1906, 7
        %v1908 = vsub.s32 %v1905, %v1907
        %v1909 = vrot.slane %v1889, %v1908
        %v1911 = vunpack.c.l.s4 1966171168
        %v1912 = vunpack.c.0.s8 %v1911
        %v1913 = vlaneseq
        %v1914 = vshrl.u32 %v1913, 7
        %v1915 = vsub.s32 %v1912, %v1914
        %v1916 = vrot.slane %v1890, %v1915
        %v1918 = vunpack.c.l.s4 1966171168
        %v1919 = vunpack.c.0.s8 %v1918
        %v1920 = vlaneseq
        %v1921 = vshrl.u32 %v1920, 7
        %v1922 = vsub.s32 %v1919, %v1921
        %v1923 = vrot.slane %v1891, %v1922
        %v1925 = vunpack.c.l.s4 1966171168
        %v1926 = vunpack.c.0.s8 %v1925
        %v1927 = vlaneseq
        %v1928 = vshrl.u32 %v1927, 7
        %v1929 = vsub.s32 %v1926, %v1928
        %v1930 = vrot.slane %v1892, %v1929
        %v1932 = vunpack.c.l.s4 1966171168
        %v1933 = vunpack.c.0.s8 %v1932
        %v1934 = vlaneseq
        %v1935 = vshrl.u32 %v1934, 7
        %v1936 = vsub.s32 %v1933, %v1935
        %v1937 = vrot.slane %v1893, %v1936
        %v1939 = vunpack.c.l.s4 1966171168
        %v1940 = vunpack.c.0.s8 %v1939
        %v1941 = vlaneseq
        %v1942 = vshrl.u32 %v1941, 7
        %v1943 = vsub.s32 %v1940, %v1942
        %v1944 = vrot.slane %v1894, %v1943
        %v1946 = vunpack.c.l.s4 1966171168
        %v1947 = vunpack.c.0.s8 %v1946
        %v1948 = vlaneseq
        %v1949 = vshrl.u32 %v1948, 7
        %v1950 = vsub.s32 %v1947, %v1949
        %v1951 = vrot.slane %v1895, %v1950
        %v1952 = vcombine.low %v1902, %v1916
        %v1953 = vcombine.high %v1902, %v1916
        %v1954 = vcombine.low %v1909, %v1923
        %v1955 = vcombine.high %v1909, %v1923
        %v1956 = vcombine.low %v1930, %v1944
        %v1957 = vcombine.high %v1930, %v1944
        %v1958 = vcombine.low %v1937, %v1951
        %v1959 = vcombine.high %v1937, %v1951
        %v1961 = vunpack.c.l.s4 1966171168
        %v1962 = vunpack.c.0.s8 %v1961
        %v1963 = vlaneseq
        %v1964 = vshrl.u32 %v1963, 7
        %v1965 = vsub.s32 %v1962, %v1964
        %v1966 = vrot.slane %v1952, %v1965
        %v1968 = vunpack.c.l.s4 1966171168
        %v1969 = vunpack.c.0.s8 %v1968
        %v1970 = vlaneseq
        %v1971 = vshrl.u32 %v1970, 7
        %v1972 = vsub.s32 %v1969, %v1971
        %v1973 = vrot.slane %v1954, %v1972
        %v1975 = vunpack.c.l.s4 1966171168
        %v1976 = vunpack.c.0.s8 %v1975
        %v1977 = vlaneseq
        %v1978 = vshrl.u32 %v1977, 7
        %v1979 = vsub.s32 %v1976, %v1978
        %v1980 = vrot.slane %v1953, %v1979
        %v1982 = vunpack.c.l.s4 1966171168
        %v1983 = vunpack.c.0.s8 %v1982
        %v1984 = vlaneseq
        %v1985 = vshrl.u32 %v1984, 7
        %v1986 = vsub.s32 %v1983, %v1985
        %v1987 = vrot.slane %v1955, %v1986
        %v1989 = vunpack.c.l.s4 1966171168
        %v1990 = vunpack.c.0.s8 %v1989
        %v1991 = vlaneseq
        %v1992 = vshrl.u32 %v1991, 7
        %v1993 = vsub.s32 %v1990, %v1992
        %v1994 = vrot.slane %v1956, %v1993
        %v1996 = vunpack.c.l.s4 1966171168
        %v1997 = vunpack.c.0.s8 %v1996
        %v1998 = vlaneseq
        %v1999 = vshrl.u32 %v1998, 7
        %v2000 = vsub.s32 %v1997, %v1999
        %v2001 = vrot.slane %v1958, %v2000
        %v2003 = vunpack.c.l.s4 1966171168
        %v2004 = vunpack.c.0.s8 %v2003
        %v2005 = vlaneseq
        %v2006 = vshrl.u32 %v2005, 7
        %v2007 = vsub.s32 %v2004, %v2006
        %v2008 = vrot.slane %v1957, %v2007
        %v2010 = vunpack.c.l.s4 1966171168
        %v2011 = vunpack.c.0.s8 %v2010
        %v2012 = vlaneseq
        %v2013 = vshrl.u32 %v2012, 7
        %v2014 = vsub.s32 %v2011, %v2013
        %v2015 = vrot.slane %v1959, %v2014
        %v2016 = vcombine.low %v1966, %v1994
        %v2017 = vcombine.high %v1966, %v1994
        %v2018 = vcombine.low %v1973, %v2001
        %v2019 = vcombine.high %v1973, %v2001
        %v2020 = vcombine.low %v1980, %v2008
        %v2021 = vcombine.high %v1980, %v2008
        %v2022 = vcombine.low %v1987, %v2015
        %v2023 = vcombine.high %v1987, %v2015
        %2040 = vmatprep.subr.mxu0 0.0
        %2041 = vmatpush1.msra.mxu0 %v1473
        %2042 = vmatprep.subr.mxu0 0.0
        %2043 = vmatpush1.msra.mxu0 %v1474
        %2044 = vmatprep.subr.mxu0 0.0
        %2045 = vmatpush1.msra.mxu0 %v1475
        %2046 = vmatprep.subr.mxu0 0.0
        %2047 = vmatpush1.msra.mxu0 %v1476
        %2048 = vmatprep.subr.mxu0 0.0
        %2049 = vmatpush1.msra.mxu0 %v1477
        %2050 = vmatprep.subr.mxu0 0.0
        %2051 = vmatpush1.msra.mxu0 %v1478
        %2052 = vmatprep.subr.mxu0 0.0
        %2053 = vmatpush1.msra.mxu0 %v1479
        %2054 = vmatprep.subr.mxu0 0.0
        %2055 = vmatpush1.msra.mxu0 %v1480
        %2056 = vmatprep.subr.mxu0 0.0
        %2057 = vmatpush1.msra.mxu0 %v1481
        %2058 = vmatprep.subr.mxu0 0.0
        %2059 = vmatpush1.msra.mxu0 %v1482
        %2060 = vmatprep.subr.mxu0 0.0
        %2061 = vmatpush1.msra.mxu0 %v1483
        %2062 = vmatprep.subr.mxu0 0.0
        %2063 = vmatpush1.msra.mxu0 %v1484
        %2064 = vmatprep.subr.mxu0 0.0
        %2065 = vmatpush1.msra.mxu0 %v1485
        %2066 = vmatprep.subr.mxu0 0.0
        %2067 = vmatpush1.msra.mxu0 %v1486
        %2068 = vmatprep.subr.mxu0 0.0
        %2069 = vmatpush1.msra.mxu0 %v1487
        %2070 = vmatprep.subr.mxu0 0.0
        %2071 = vmatpush1.msra.mxu0 %v1488
        %2072 = vmatprep.subr.mxu0 0.0
        %2073 = vmatpush1.msra.mxu0 %v1489
        %2074 = vmatprep.subr.mxu0 0.0
        %2075 = vmatpush1.msra.mxu0 %v1490
        %2076 = vmatprep.subr.mxu0 0.0
        %2077 = vmatpush1.msra.mxu0 %v1491
        %2078 = vmatprep.subr.mxu0 0.0
        %2079 = vmatpush1.msra.mxu0 %v1492
        %2080 = vmatprep.subr.mxu0 0.0
        %2081 = vmatpush1.msra.mxu0 %v1493
        %2082 = vmatprep.subr.mxu0 0.0
        %2083 = vmatpush1.msra.mxu0 %v1494
        %2084 = vmatprep.subr.mxu0 0.0
        %2085 = vmatpush1.msra.mxu0 %v1495
        %2086 = vmatprep.subr.mxu0 0.0
        %2087 = vmatpush1.msra.mxu0 %v1496
        %2088 = vmatprep.subr.mxu0 0.0
        %2089 = vmatpush1.msra.mxu0 %v1497
        %2090 = vmatprep.subr.mxu0 0.0
        %2091 = vmatpush1.msra.mxu0 %v1498
        %2092 = vmatprep.subr.mxu0 0.0
        %2093 = vmatpush1.msra.mxu0 %v1499
        %2094 = vmatprep.subr.mxu0 0.0
        %2095 = vmatpush1.msra.mxu0 %v1500
        %2096 = vmatprep.subr.mxu0 0.0
        %2097 = vmatpush1.msra.mxu0 %v1501
        %2098 = vmatprep.subr.mxu0 0.0
        %2099 = vmatpush1.msra.mxu0 %v1502
        %2100 = vmatprep.subr.mxu0 0.0
        %2101 = vmatpush1.msra.mxu0 %v1503
        %2102 = vmatprep.subr.mxu0 0.0
        %2103 = vmatpush1.msra.mxu0 %v1504
        %2104 = vmatprep.mubr.f32.mxu0 %v1884
        %2105 = vmatmul.mubr.f32.gmra.mrb[0].mxu0 %v1880
        %v2106 = vpop.f32.mrb[0].mxu0
        %v2107 = vadd.f32 %v1734, %v2106
        %v2108 = vpop.f32.mrb[0].mxu0
        %2109 = vdwg.mxu0
        %2110 = vmatprep.subr.mxu0 0.0
        %2111 = vmatpush1.msra.mxu0 %v1505
        %2112 = vmatprep.subr.mxu0 0.0
        %2113 = vmatpush1.msra.mxu0 %v1506
        %2114 = vmatprep.subr.mxu0 0.0
        %2115 = vmatpush1.msra.mxu0 %v1507
        %2116 = vmatprep.subr.mxu0 0.0
        %2117 = vmatpush1.msra.mxu0 %v1508
        %2118 = vmatprep.subr.mxu0 0.0
        %2119 = vmatpush1.msra.mxu0 %v1509
        %2120 = vmatprep.subr.mxu0 0.0
        %2121 = vmatpush1.msra.mxu0 %v1510
        %2122 = vmatprep.subr.mxu0 0.0
        %2123 = vmatpush1.msra.mxu0 %v1511
        %2124 = vmatprep.subr.mxu0 0.0
        %2125 = vmatpush1.msra.mxu0 %v1512
        %2126 = vmatprep.subr.mxu0 0.0
        %2127 = vmatpush1.msra.mxu0 %v1513
        %2128 = vmatprep.subr.mxu0 0.0
        %2129 = vmatpush1.msra.mxu0 %v1514
        %2130 = vmatprep.subr.mxu0 0.0
        %2131 = vmatpush1.msra.mxu0 %v1515
        %2132 = vmatprep.subr.mxu0 0.0
        %2133 = vmatpush1.msra.mxu0 %v1516
        %2134 = vmatprep.subr.mxu0 0.0
        %2135 = vmatpush1.msra.mxu0 %v1517
        %2136 = vmatprep.subr.mxu0 0.0
        %2137 = vmatpush1.msra.mxu0 %v1518
        %2138 = vmatprep.subr.mxu0 0.0
        %2139 = vmatpush1.msra.mxu0 %v1519
        %2140 = vmatprep.subr.mxu0 0.0
        %2141 = vmatpush1.msra.mxu0 %v1520
        %2142 = vmatprep.subr.mxu0 0.0
        %2143 = vmatpush1.msra.mxu0 %v1521
        %2144 = vmatprep.subr.mxu0 0.0
        %2145 = vmatpush1.msra.mxu0 %v1522
        %2146 = vmatprep.subr.mxu0 0.0
        %2147 = vmatpush1.msra.mxu0 %v1523
        %2148 = vmatprep.subr.mxu0 0.0
        %2149 = vmatpush1.msra.mxu0 %v1524
        %2150 = vmatprep.subr.mxu0 0.0
        %2151 = vmatpush1.msra.mxu0 %v1525
        %2152 = vmatprep.subr.mxu0 0.0
        %2153 = vmatpush1.msra.mxu0 %v1526
        %2154 = vmatprep.subr.mxu0 0.0
        %2155 = vmatpush1.msra.mxu0 %v1527
        %2156 = vmatprep.subr.mxu0 0.0
        %2157 = vmatpush1.msra.mxu0 %v1528
        %2158 = vmatprep.subr.mxu0 0.0
        %2159 = vmatpush1.msra.mxu0 %v1529
        %2160 = vmatprep.subr.mxu0 0.0
        %2161 = vmatpush1.msra.mxu0 %v1530
        %2162 = vmatprep.subr.mxu0 0.0
        %2163 = vmatpush1.msra.mxu0 %v1531
        %2164 = vmatprep.subr.mxu0 0.0
        %2165 = vmatpush1.msra.mxu0 %v1532
        %2166 = vmatprep.subr.mxu0 0.0
        %2167 = vmatpush1.msra.mxu0 %v1533
        %2168 = vmatprep.subr.mxu0 0.0
        %2169 = vmatpush1.msra.mxu0 %v1534
        %2170 = vmatprep.subr.mxu0 0.0
        %2171 = vmatpush1.msra.mxu0 %v1535
        %2172 = vmatprep.subr.mxu0 0.0
        %2173 = vmatpush1.msra.mxu0 %v1536
        %2174 = vmatprep.mubr.f32.mxu0 %v1885
        %2175 = vmatmul.mubr.f32.gmra.mrb[0].mxu0 %v1881
        %v2176 = vpop.f32.mrb[0].mxu0
        %v2177 = vadd.f32 %v2107, %v2176
        %v2178 = vpop.f32.mrb[0].mxu0
        %2179 = vdwg.mxu0
        %2180 = vmatprep.subr.mxu0 0.0
        %2181 = vmatpush1.msra.mxu0 %v1537
        %2182 = vmatprep.subr.mxu0 0.0
        %2183 = vmatpush1.msra.mxu0 %v1538
        %2184 = vmatprep.subr.mxu0 0.0
        %2185 = vmatpush1.msra.mxu0 %v1539
        %2186 = vmatprep.subr.mxu0 0.0
        %2187 = vmatpush1.msra.mxu0 %v1540
        %2188 = vmatprep.subr.mxu0 0.0
        %2189 = vmatpush1.msra.mxu0 %v1541
        %2190 = vmatprep.subr.mxu0 0.0
        %2191 = vmatpush1.msra.mxu0 %v1542
        %2192 = vmatprep.subr.mxu0 0.0
        %2193 = vmatpush1.msra.mxu0 %v1543
        %2194 = vmatprep.subr.mxu0 0.0
        %2195 = vmatpush1.msra.mxu0 %v1544
        %2196 = vmatprep.subr.mxu0 0.0
        %2197 = vmatpush1.msra.mxu0 %v1545
        %2198 = vmatprep.subr.mxu0 0.0
        %2199 = vmatpush1.msra.mxu0 %v1546
        %2200 = vmatprep.subr.mxu0 0.0
        %2201 = vmatpush1.msra.mxu0 %v1547
        %2202 = vmatprep.subr.mxu0 0.0
        %2203 = vmatpush1.msra.mxu0 %v1548
        %2204 = vmatprep.subr.mxu0 0.0
        %2205 = vmatpush1.msra.mxu0 %v1549
        %2206 = vmatprep.subr.mxu0 0.0
        %2207 = vmatpush1.msra.mxu0 %v1550
        %2208 = vmatprep.subr.mxu0 0.0
        %2209 = vmatpush1.msra.mxu0 %v1551
        %2210 = vmatprep.subr.mxu0 0.0
        %2211 = vmatpush1.msra.mxu0 %v1552
        %2212 = vmatprep.subr.mxu0 0.0
        %2213 = vmatpush1.msra.mxu0 %v1553
        %2214 = vmatprep.subr.mxu0 0.0
        %2215 = vmatpush1.msra.mxu0 %v1554
        %2216 = vmatprep.subr.mxu0 0.0
        %2217 = vmatpush1.msra.mxu0 %v1555
        %2218 = vmatprep.subr.mxu0 0.0
        %2219 = vmatpush1.msra.mxu0 %v1556
        %2220 = vmatprep.subr.mxu0 0.0
        %2221 = vmatpush1.msra.mxu0 %v1557
        %2222 = vmatprep.subr.mxu0 0.0
        %2223 = vmatpush1.msra.mxu0 %v1558
        %2224 = vmatprep.subr.mxu0 0.0
        %2225 = vmatpush1.msra.mxu0 %v1559
        %2226 = vmatprep.subr.mxu0 0.0
        %2227 = vmatpush1.msra.mxu0 %v1560
        %2228 = vmatprep.subr.mxu0 0.0
        %2229 = vmatpush1.msra.mxu0 %v1561
        %2230 = vmatprep.subr.mxu0 0.0
        %2231 = vmatpush1.msra.mxu0 %v1562
        %2232 = vmatprep.subr.mxu0 0.0
        %2233 = vmatpush1.msra.mxu0 %v1563
        %2234 = vmatprep.subr.mxu0 0.0
        %2235 = vmatpush1.msra.mxu0 %v1564
        %2236 = vmatprep.subr.mxu0 0.0
        %2237 = vmatpush1.msra.mxu0 %v1565
        %2238 = vmatprep.subr.mxu0 0.0
        %2239 = vmatpush1.msra.mxu0 %v1566
        %2240 = vmatprep.subr.mxu0 0.0
        %2241 = vmatpush1.msra.mxu0 %v1567
        %2242 = vmatprep.subr.mxu0 0.0
        %2243 = vmatpush1.msra.mxu0 %v1568
        %2244 = vmatprep.mubr.f32.mxu0 %v1886
        %2245 = vmatmul.mubr.f32.gmra.mrb[0].mxu0 %v1882
        %v2246 = vpop.f32.mrb[0].mxu0
        %v2247 = vadd.f32 %v2177, %v2246
        %v2248 = vpop.f32.mrb[0].mxu0
        %2249 = vdwg.mxu0
        %2250 = vmatprep.subr.mxu0 0.0
        %2251 = vmatpush1.msra.mxu0 %v1569
        %2252 = vmatprep.subr.mxu0 0.0
        %2253 = vmatpush1.msra.mxu0 %v1570
        %2254 = vmatprep.subr.mxu0 0.0
        %2255 = vmatpush1.msra.mxu0 %v1571
        %2256 = vmatprep.subr.mxu0 0.0
        %2257 = vmatpush1.msra.mxu0 %v1572
        %2258 = vmatprep.subr.mxu0 0.0
        %2259 = vmatpush1.msra.mxu0 %v1573
        %2260 = vmatprep.subr.mxu0 0.0
        %2261 = vmatpush1.msra.mxu0 %v1574
        %2262 = vmatprep.subr.mxu0 0.0
        %2263 = vmatpush1.msra.mxu0 %v1575
        %2264 = vmatprep.subr.mxu0 0.0
        %2265 = vmatpush1.msra.mxu0 %v1576
        %2266 = vmatprep.subr.mxu0 0.0
        %2267 = vmatpush1.msra.mxu0 %v1577
        %2268 = vmatprep.subr.mxu0 0.0
        %2269 = vmatpush1.msra.mxu0 %v1578
        %2270 = vmatprep.subr.mxu0 0.0
        %2271 = vmatpush1.msra.mxu0 %v1579
        %2272 = vmatprep.subr.mxu0 0.0
        %2273 = vmatpush1.msra.mxu0 %v1580
        %2274 = vmatprep.subr.mxu0 0.0
        %2275 = vmatpush1.msra.mxu0 %v1581
        %2276 = vmatprep.subr.mxu0 0.0
        %2277 = vmatpush1.msra.mxu0 %v1582
        %2278 = vmatprep.subr.mxu0 0.0
        %2279 = vmatpush1.msra.mxu0 %v1583
        %2280 = vmatprep.subr.mxu0 0.0
        %2281 = vmatpush1.msra.mxu0 %v1584
        %2282 = vmatprep.subr.mxu0 0.0
        %2283 = vmatpush1.msra.mxu0 %v1585
        %2284 = vmatprep.subr.mxu0 0.0
        %2285 = vmatpush1.msra.mxu0 %v1586
        %2286 = vmatprep.subr.mxu0 0.0
        %2287 = vmatpush1.msra.mxu0 %v1587
        %2288 = vmatprep.subr.mxu0 0.0
        %2289 = vmatpush1.msra.mxu0 %v1588
        %2290 = vmatprep.subr.mxu0 0.0
        %2291 = vmatpush1.msra.mxu0 %v1589
        %2292 = vmatprep.subr.mxu0 0.0
        %2293 = vmatpush1.msra.mxu0 %v1590
        %2294 = vmatprep.subr.mxu0 0.0
        %2295 = vmatpush1.msra.mxu0 %v1591
        %2296 = vmatprep.subr.mxu0 0.0
        %2297 = vmatpush1.msra.mxu0 %v1592
        %2298 = vmatprep.subr.mxu0 0.0
        %2299 = vmatpush1.msra.mxu0 %v1593
        %2300 = vmatprep.subr.mxu0 0.0
        %2301 = vmatpush1.msra.mxu0 %v1594
        %2302 = vmatprep.subr.mxu0 0.0
        %2303 = vmatpush1.msra.mxu0 %v1595
        %2304 = vmatprep.subr.mxu0 0.0
        %2305 = vmatpush1.msra.mxu0 %v1596
        %2306 = vmatprep.subr.mxu0 0.0
        %2307 = vmatpush1.msra.mxu0 %v1597
        %2308 = vmatprep.subr.mxu0 0.0
        %2309 = vmatpush1.msra.mxu0 %v1598
        %2310 = vmatprep.subr.mxu0 0.0
        %2311 = vmatpush1.msra.mxu0 %v1599
        %2312 = vmatprep.subr.mxu0 0.0
        %2313 = vmatpush1.msra.mxu0 %v1600
        %2314 = vmatprep.mubr.f32.mxu0 %v1887
        %2315 = vmatmul.mubr.f32.gmra.mrb[0].mxu0 %v1883
        %v2316 = vpop.f32.mrb[0].mxu0
        %v2317 = vadd.f32 %v2247, %v2316
        %v2318 = vpop.f32.mrb[0].mxu0
        %2319 = vdwg.mxu0
        %2320 = vmatprep.subr.mxu0 0.0
        %2321 = vmatpush1.msra.mxu0 %v1601
        %2322 = vmatprep.subr.mxu0 0.0
        %2323 = vmatpush1.msra.mxu0 %v1602
        %2324 = vmatprep.subr.mxu0 0.0
        %2325 = vmatpush1.msra.mxu0 %v1603
        %2326 = vmatprep.subr.mxu0 0.0
        %2327 = vmatpush1.msra.mxu0 %v1604
        %2328 = vmatprep.subr.mxu0 0.0
        %2329 = vmatpush1.msra.mxu0 %v1605
        %2330 = vmatprep.subr.mxu0 0.0
        %2331 = vmatpush1.msra.mxu0 %v1606
        %2332 = vmatprep.subr.mxu0 0.0
        %2333 = vmatpush1.msra.mxu0 %v1607
        %2334 = vmatprep.subr.mxu0 0.0
        %2335 = vmatpush1.msra.mxu0 %v1608
        %2336 = vmatprep.subr.mxu0 0.0
        %2337 = vmatpush1.msra.mxu0 %v1609
        %2338 = vmatprep.subr.mxu0 0.0
        %2339 = vmatpush1.msra.mxu0 %v1610
        %2340 = vmatprep.subr.mxu0 0.0
        %2341 = vmatpush1.msra.mxu0 %v1611
        %2342 = vmatprep.subr.mxu0 0.0
        %2343 = vmatpush1.msra.mxu0 %v1612
        %2344 = vmatprep.subr.mxu0 0.0
        %2345 = vmatpush1.msra.mxu0 %v1613
        %2346 = vmatprep.subr.mxu0 0.0
        %2347 = vmatpush1.msra.mxu0 %v1614
        %2348 = vmatprep.subr.mxu0 0.0
        %2349 = vmatpush1.msra.mxu0 %v1615
        %2350 = vmatprep.subr.mxu0 0.0
        %2351 = vmatpush1.msra.mxu0 %v1616
        %2352 = vmatprep.subr.mxu0 0.0
        %2353 = vmatpush1.msra.mxu0 %v1617
        %2354 = vmatprep.subr.mxu0 0.0
        %2355 = vmatpush1.msra.mxu0 %v1618
        %2356 = vmatprep.subr.mxu0 0.0
        %2357 = vmatpush1.msra.mxu0 %v1619
        %2358 = vmatprep.subr.mxu0 0.0
        %2359 = vmatpush1.msra.mxu0 %v1620
        %2360 = vmatprep.subr.mxu0 0.0
        %2361 = vmatpush1.msra.mxu0 %v1621
        %2362 = vmatprep.subr.mxu0 0.0
        %2363 = vmatpush1.msra.mxu0 %v1622
        %2364 = vmatprep.subr.mxu0 0.0
        %2365 = vmatpush1.msra.mxu0 %v1623
        %2366 = vmatprep.subr.mxu0 0.0
        %2367 = vmatpush1.msra.mxu0 %v1624
        %2368 = vmatprep.subr.mxu0 0.0
        %2369 = vmatpush1.msra.mxu0 %v1625
        %2370 = vmatprep.subr.mxu0 0.0
        %2371 = vmatpush1.msra.mxu0 %v1626
        %2372 = vmatprep.subr.mxu0 0.0
        %2373 = vmatpush1.msra.mxu0 %v1627
        %2374 = vmatprep.subr.mxu0 0.0
        %2375 = vmatpush1.msra.mxu0 %v1628
        %2376 = vmatprep.subr.mxu0 0.0
        %2377 = vmatpush1.msra.mxu0 %v1629
        %2378 = vmatprep.subr.mxu0 0.0
        %2379 = vmatpush1.msra.mxu0 %v1630
        %2380 = vmatprep.subr.mxu0 0.0
        %2381 = vmatpush1.msra.mxu0 %v1631
        %2382 = vmatprep.subr.mxu0 0.0
        %2383 = vmatpush1.msra.mxu0 %v1632
        %2384 = vmatprep.mubr.f32.mxu0 %v2020
        %2385 = vmatmul.mubr.f32.gmra.mrb[0].mxu0 %v2016
        %v2386 = vpop.f32.mrb[0].mxu0
        %v2387 = vadd.f32 %v2317, %v2386
        %v2388 = vpop.f32.mrb[0].mxu0
        %2389 = vdwg.mxu0
        %2390 = vmatprep.subr.mxu0 0.0
        %2391 = vmatpush1.msra.mxu0 %v1633
        %2392 = vmatprep.subr.mxu0 0.0
        %2393 = vmatpush1.msra.mxu0 %v1634
        %2394 = vmatprep.subr.mxu0 0.0
        %2395 = vmatpush1.msra.mxu0 %v1635
        %2396 = vmatprep.subr.mxu0 0.0
        %2397 = vmatpush1.msra.mxu0 %v1636
        %2398 = vmatprep.subr.mxu0 0.0
        %2399 = vmatpush1.msra.mxu0 %v1637
        %2400 = vmatprep.subr.mxu0 0.0
        %2401 = vmatpush1.msra.mxu0 %v1638
        %2402 = vmatprep.subr.mxu0 0.0
        %2403 = vmatpush1.msra.mxu0 %v1639
        %2404 = vmatprep.subr.mxu0 0.0
        %2405 = vmatpush1.msra.mxu0 %v1640
        %2406 = vmatprep.subr.mxu0 0.0
        %2407 = vmatpush1.msra.mxu0 %v1641
        %2408 = vmatprep.subr.mxu0 0.0
        %2409 = vmatpush1.msra.mxu0 %v1642
        %2410 = vmatprep.subr.mxu0 0.0
        %2411 = vmatpush1.msra.mxu0 %v1643
        %2412 = vmatprep.subr.mxu0 0.0
        %2413 = vmatpush1.msra.mxu0 %v1644
        %2414 = vmatprep.subr.mxu0 0.0
        %2415 = vmatpush1.msra.mxu0 %v1645
        %2416 = vmatprep.subr.mxu0 0.0
        %2417 = vmatpush1.msra.mxu0 %v1646
        %2418 = vmatprep.subr.mxu0 0.0
        %2419 = vmatpush1.msra.mxu0 %v1647
        %2420 = vmatprep.subr.mxu0 0.0
        %2421 = vmatpush1.msra.mxu0 %v1648
        %2422 = vmatprep.subr.mxu0 0.0
        %2423 = vmatpush1.msra.mxu0 %v1649
        %2424 = vmatprep.subr.mxu0 0.0
        %2425 = vmatpush1.msra.mxu0 %v1650
        %2426 = vmatprep.subr.mxu0 0.0
        %2427 = vmatpush1.msra.mxu0 %v1651
        %2428 = vmatprep.subr.mxu0 0.0
        %2429 = vmatpush1.msra.mxu0 %v1652
        %2430 = vmatprep.subr.mxu0 0.0
        %2431 = vmatpush1.msra.mxu0 %v1653
        %2432 = vmatprep.subr.mxu0 0.0
        %2433 = vmatpush1.msra.mxu0 %v1654
        %2434 = vmatprep.subr.mxu0 0.0
        %2435 = vmatpush1.msra.mxu0 %v1655
        %2436 = vmatprep.subr.mxu0 0.0
        %2437 = vmatpush1.msra.mxu0 %v1656
        %2438 = vmatprep.subr.mxu0 0.0
        %2439 = vmatpush1.msra.mxu0 %v1657
        %2440 = vmatprep.subr.mxu0 0.0
        %2441 = vmatpush1.msra.mxu0 %v1658
        %2442 = vmatprep.subr.mxu0 0.0
        %2443 = vmatpush1.msra.mxu0 %v1659
        %2444 = vmatprep.subr.mxu0 0.0
        %2445 = vmatpush1.msra.mxu0 %v1660
        %2446 = vmatprep.subr.mxu0 0.0
        %2447 = vmatpush1.msra.mxu0 %v1661
        %2448 = vmatprep.subr.mxu0 0.0
        %2449 = vmatpush1.msra.mxu0 %v1662
        %2450 = vmatprep.subr.mxu0 0.0
        %2451 = vmatpush1.msra.mxu0 %v1663
        %2452 = vmatprep.subr.mxu0 0.0
        %2453 = vmatpush1.msra.mxu0 %v1664
        %2454 = vmatprep.mubr.f32.mxu0 %v2021
        %2455 = vmatmul.mubr.f32.gmra.mrb[0].mxu0 %v2017
        %v2456 = vpop.f32.mrb[0].mxu0
        %v2457 = vadd.f32 %v2387, %v2456
        %v2458 = vpop.f32.mrb[0].mxu0
        %2459 = vdwg.mxu0
        %2460 = vmatprep.subr.mxu0 0.0
        %2461 = vmatpush1.msra.mxu0 %v1665
        %2462 = vmatprep.subr.mxu0 0.0
        %2463 = vmatpush1.msra.mxu0 %v1666
        %2464 = vmatprep.subr.mxu0 0.0
        %2465 = vmatpush1.msra.mxu0 %v1667
        %2466 = vmatprep.subr.mxu0 0.0
        %2467 = vmatpush1.msra.mxu0 %v1668
        %2468 = vmatprep.subr.mxu0 0.0
        %2469 = vmatpush1.msra.mxu0 %v1669
        %2470 = vmatprep.subr.mxu0 0.0
        %2471 = vmatpush1.msra.mxu0 %v1670
        %2472 = vmatprep.subr.mxu0 0.0
        %2473 = vmatpush1.msra.mxu0 %v1671
        %2474 = vmatprep.subr.mxu0 0.0
        %2475 = vmatpush1.msra.mxu0 %v1672
        %2476 = vmatprep.subr.mxu0 0.0
        %2477 = vmatpush1.msra.mxu0 %v1673
        %2478 = vmatprep.subr.mxu0 0.0
        %2479 = vmatpush1.msra.mxu0 %v1674
        %2480 = vmatprep.subr.mxu0 0.0
        %2481 = vmatpush1.msra.mxu0 %v1675
        %2482 = vmatprep.subr.mxu0 0.0
        %2483 = vmatpush1.msra.mxu0 %v1676
        %2484 = vmatprep.subr.mxu0 0.0
        %2485 = vmatpush1.msra.mxu0 %v1677
        %2486 = vmatprep.subr.mxu0 0.0
        %2487 = vmatpush1.msra.mxu0 %v1678
        %2488 = vmatprep.subr.mxu0 0.0
        %2489 = vmatpush1.msra.mxu0 %v1679
        %2490 = vmatprep.subr.mxu0 0.0
        %2491 = vmatpush1.msra.mxu0 %v1680
        %2492 = vmatprep.subr.mxu0 0.0
        %2493 = vmatpush1.msra.mxu0 %v1681
        %2494 = vmatprep.subr.mxu0 0.0
        %2495 = vmatpush1.msra.mxu0 %v1682
        %2496 = vmatprep.subr.mxu0 0.0
        %2497 = vmatpush1.msra.mxu0 %v1683
        %2498 = vmatprep.subr.mxu0 0.0
        %2499 = vmatpush1.msra.mxu0 %v1684
        %2500 = vmatprep.subr.mxu0 0.0
        %2501 = vmatpush1.msra.mxu0 %v1685
        %2502 = vmatprep.subr.mxu0 0.0
        %2503 = vmatpush1.msra.mxu0 %v1686
        %2504 = vmatprep.subr.mxu0 0.0
        %2505 = vmatpush1.msra.mxu0 %v1687
        %2506 = vmatprep.subr.mxu0 0.0
        %2507 = vmatpush1.msra.mxu0 %v1688
        %2508 = vmatprep.subr.mxu0 0.0
        %2509 = vmatpush1.msra.mxu0 %v1689
        %2510 = vmatprep.subr.mxu0 0.0
        %2511 = vmatpush1.msra.mxu0 %v1690
        %2512 = vmatprep.subr.mxu0 0.0
        %2513 = vmatpush1.msra.mxu0 %v1691
        %2514 = vmatprep.subr.mxu0 0.0
        %2515 = vmatpush1.msra.mxu0 %v1692
        %2516 = vmatprep.subr.mxu0 0.0
        %2517 = vmatpush1.msra.mxu0 %v1693
        %2518 = vmatprep.subr.mxu0 0.0
        %2519 = vmatpush1.msra.mxu0 %v1694
        %2520 = vmatprep.subr.mxu0 0.0
        %2521 = vmatpush1.msra.mxu0 %v1695
        %2522 = vmatprep.subr.mxu0 0.0
        %2523 = vmatpush1.msra.mxu0 %v1696
        %2524 = vmatprep.mubr.f32.mxu0 %v2022
        %2525 = vmatmul.mubr.f32.gmra.mrb[0].mxu0 %v2018
        %v2526 = vpop.f32.mrb[0].mxu0
        %v2527 = vadd.f32 %v2457, %v2526
        %v2528 = vpop.f32.mrb[0].mxu0
        %2529 = vdwg.mxu0
        %2530 = vmatprep.subr.mxu0 0.0
        %2531 = vmatpush1.msra.mxu0 %v1697
        %2532 = vmatprep.subr.mxu0 0.0
        %2533 = vmatpush1.msra.mxu0 %v1698
        %2534 = vmatprep.subr.mxu0 0.0
        %2535 = vmatpush1.msra.mxu0 %v1699
        %2536 = vmatprep.subr.mxu0 0.0
        %2537 = vmatpush1.msra.mxu0 %v1700
        %2538 = vmatprep.subr.mxu0 0.0
        %2539 = vmatpush1.msra.mxu0 %v1701
        %2540 = vmatprep.subr.mxu0 0.0
        %2541 = vmatpush1.msra.mxu0 %v1702
        %2542 = vmatprep.subr.mxu0 0.0
        %2543 = vmatpush1.msra.mxu0 %v1703
        %2544 = vmatprep.subr.mxu0 0.0
        %2545 = vmatpush1.msra.mxu0 %v1704
        %2546 = vmatprep.subr.mxu0 0.0
        %2547 = vmatpush1.msra.mxu0 %v1705
        %2548 = vmatprep.subr.mxu0 0.0
        %2549 = vmatpush1.msra.mxu0 %v1706
        %2550 = vmatprep.subr.mxu0 0.0
        %2551 = vmatpush1.msra.mxu0 %v1707
        %2552 = vmatprep.subr.mxu0 0.0
        %2553 = vmatpush1.msra.mxu0 %v1708
        %2554 = vmatprep.subr.mxu0 0.0
        %2555 = vmatpush1.msra.mxu0 %v1709
        %2556 = vmatprep.subr.mxu0 0.0
        %2557 = vmatpush1.msra.mxu0 %v1710
        %2558 = vmatprep.subr.mxu0 0.0
        %2559 = vmatpush1.msra.mxu0 %v1711
        %2560 = vmatprep.subr.mxu0 0.0
        %2561 = vmatpush1.msra.mxu0 %v1712
        %2562 = vmatprep.subr.mxu0 0.0
        %2563 = vmatpush1.msra.mxu0 %v1713
        %2564 = vmatprep.subr.mxu0 0.0
        %2565 = vmatpush1.msra.mxu0 %v1714
        %2566 = vmatprep.subr.mxu0 0.0
        %2567 = vmatpush1.msra.mxu0 %v1715
        %2568 = vmatprep.subr.mxu0 0.0
        %2569 = vmatpush1.msra.mxu0 %v1716
        %2570 = vmatprep.subr.mxu0 0.0
        %2571 = vmatpush1.msra.mxu0 %v1717
        %2572 = vmatprep.subr.mxu0 0.0
        %2573 = vmatpush1.msra.mxu0 %v1718
        %2574 = vmatprep.subr.mxu0 0.0
        %2575 = vmatpush1.msra.mxu0 %v1719
        %2576 = vmatprep.subr.mxu0 0.0
        %2577 = vmatpush1.msra.mxu0 %v1720
        %2578 = vmatprep.subr.mxu0 0.0
        %2579 = vmatpush1.msra.mxu0 %v1721
        %2580 = vmatprep.subr.mxu0 0.0
        %2581 = vmatpush1.msra.mxu0 %v1722
        %2582 = vmatprep.subr.mxu0 0.0
        %2583 = vmatpush1.msra.mxu0 %v1723
        %2584 = vmatprep.subr.mxu0 0.0
        %2585 = vmatpush1.msra.mxu0 %v1724
        %2586 = vmatprep.subr.mxu0 0.0
        %2587 = vmatpush1.msra.mxu0 %v1725
        %2588 = vmatprep.subr.mxu0 0.0
        %2589 = vmatpush1.msra.mxu0 %v1726
        %2590 = vmatprep.subr.mxu0 0.0
        %2591 = vmatpush1.msra.mxu0 %v1727
        %2592 = vmatprep.subr.mxu0 0.0
        %2593 = vmatpush1.msra.mxu0 %v1728
        %2594 = vmatprep.mubr.f32.mxu0 %v2023
        %2595 = vmatmul.mubr.f32.gmra.mrb[0].mxu0 %v2019
        %v2596 = vpop.f32.mrb[0].mxu0
        %v2597 = vadd.f32 %v2527, %v2596
        %v2598 = vpop.f32.mrb[0].mxu0
        %2599 = vdwg.mxu0
        %2600 = vst [vmem:[%s407] sm:$0xff] %v2597
        %s2601 = sand.u32 %s254, 1
        %s2602 = scalar_lea.sflag [#allocation5], %s2601
        %s2603 = sand.u32 %s254, 1
        %s2604 = smul.addr %s2603, 8
        %s2605 = scalar_lea.vmem [#allocation6], %s2604
        %s2606 = sand.u32 %s280, 1
        %s2607 = scalar_lea.sflag [#allocation8], %s2606
        %s2608 = sand.u32 %s280, 1
        %s2609 = smul.addr %s2608, 8
        %s2610 = scalar_lea.vmem [#allocation7], %s2609
        // Predicated region
        $region65: #{tpu_custom_call.1} parent=59 // pred_check
          %p2611 = pneg %p264
        $region66: #{tpu_custom_call.1} parent=59 // pred_check_branch
          %2613 = sbr.rel (%p2611) target = $region68
        $region67: #{tpu_custom_call.1} parent=59 // pred_region
          %s2615 = ssub.s32 128, 128
          %2616 = vsyncadd %s2602, %s2615
          %s2617 = smul.addr %s31, 128
          %s2618 = scalar_lea.hbm %s10, %s2617
          %s2620 = sshll.u32 %s2605, 4
          %s2621 = int_to_ptr.vmem [resolvable:$true] %s2620
          %2623 = dma.vmem_to_hbm [thread:$0]  %s2621, 128, %s2618, %s2602
        $region68: #{tpu_custom_call.1} parent=59 // pred_fallthru
          _
        // Predicated region
        $region69: #{tpu_custom_call.1} parent=59 // pred_check
          %p2624 = pneg %p290
        $region70: #{tpu_custom_call.1} parent=59 // pred_check_branch
          %2626 = sbr.rel (%p2624) target = $region72
        $region71: #{tpu_custom_call.1} parent=59 // pred_region
          %s2628 = ssub.s32 128, 128
          %2629 = vsyncadd %s2607, %s2628
          %s2630 = smul.addr %s31, 128
          %s2631 = scalar_lea.hbm %s11, %s2630
          %s2633 = sshll.u32 %s2610, 4
          %s2634 = int_to_ptr.vmem [resolvable:$true] %s2633
          %2636 = dma.vmem_to_hbm [thread:$0]  %s2634, 128, %s2631, %s2607
        $region72: #{tpu_custom_call.1} parent=59 // pred_fallthru
          _
      $region60: #{tpu_custom_call.1} parent=5 // pred_fallthru
        _
      %p2637 = scmp.le.s32.totalorder 2, %s26
      // Predicated region
      $region73: #{tpu_custom_call.1} parent=5 // pred_check
        %p2638 = pneg %p2637
      $region74: #{tpu_custom_call.1} parent=5 // pred_check_branch
        %2640 = sbr.rel (%p2638) target = $region76
      $region75: #{tpu_custom_call.1} parent=5 // pred_region
        %s2641 = ssub.s32 %s26, 2
        // Predicated region
        $region77: #{tpu_custom_call.1} parent=75 // pred_check
          %p2642 = pneg %p270
        $region78: #{tpu_custom_call.1} parent=75 // pred_check_branch
          %2644 = sbr.rel (%p2642) target = $region80
        $region79: #{tpu_custom_call.1} parent=75 // pred_region
          %s2645 = sand.u32 %s255, 1
          %s2646 = scalar_lea.sflag [#allocation5], %s2645
          %s2647 = sand.u32 %s255, 1
          %s2648 = smul.addr %s2647, 8
          %s2649 = scalar_lea.vmem [#allocation6], %s2648
          %2650 = dma.done %s2646, 128
        $region80: #{tpu_custom_call.1} parent=75 // pred_fallthru
          _
        // Predicated region
        $region81: #{tpu_custom_call.1} parent=75 // pred_check
          %p2651 = pneg %p296
        $region82: #{tpu_custom_call.1} parent=75 // pred_check_branch
          %2653 = sbr.rel (%p2651) target = $region84
        $region83: #{tpu_custom_call.1} parent=75 // pred_region
          %s2654 = sand.u32 %s281, 1
          %s2655 = scalar_lea.sflag [#allocation8], %s2654
          %s2656 = sand.u32 %s281, 1
          %s2657 = smul.addr %s2656, 8
          %s2658 = scalar_lea.vmem [#allocation7], %s2657
          %2659 = dma.done %s2655, 128
        $region84: #{tpu_custom_call.1} parent=75 // pred_fallthru
          _
      $region76: #{tpu_custom_call.1} parent=5 // pred_fallthru
        _
    $region6: #{tpu_custom_call.1} parent=1 // loop_footer
      %s30 = sadd.s32 1, %s26
    $region7: #{tpu_custom_call.1} parent=1 // loop_footer_branch
      %25 = sbr.rel target = $region3
    $region8: #{tpu_custom_call.1} parent=1 // loop_exit
      _
    %2660 = vsyncpa [#allocation4], 1
    %s2661 = scalar_lea.sflag [#allocation4], 1
    %2662 = vsyncpa %s2661, 1
    %2663 = vsyncpa [#allocation5], 1
    %s2664 = scalar_lea.sflag [#allocation5], 1
    %2665 = vsyncpa %s2664, 1
    %2666 = vsyncpa [#allocation8], 1
    %s2667 = scalar_lea.sflag [#allocation8], 1
    %2668 = vsyncpa %s2667, 1

</llo_original>
